<compile_context>
chip_gen: v7x
topology: tpu7x:2x2x1
jax: 0.10.0
libtpu: 0.0.40
codegen_flags: <defaults>
</compile_context>

<pallas_src>
import jax
import jax.numpy as jnp
from jax.experimental import pallas as pl
from jax.experimental.pallas import tpu as pltpu

LANE = 128


def _round_up(x, m):
    return (x + m - 1) // m * m


def _pad2d(a, rows, cols):
    return jnp.pad(a, ((0, rows - a.shape[0]), (0, cols - a.shape[1])))


# --------------------------------------------------------------------------- #
# Fused kernel:
#   acc[i]  = A_hat[i, :] @ XW1                (reduction over k blocks, f32 scratch)
#   h1      = relu(acc + b1)                   (dropout = identity, eval mode)
#   h1w2    = h1 @ W2                          (layer-2 feature transform, fused)
#   out    += PA[:, i] @ h1w2                  (layer-2 aggregation + mean pool,
#                                               resident [g_pad, cout_p] f32 output)
# --------------------------------------------------------------------------- #
def _fused_gcn_kernel(a_ref, xw_ref, b1_ref, w2_ref, pa_ref, o_ref, acc_ref):
    i = pl.program_id(0)
    k = pl.program_id(1)
    tile_m, tile_k = a_ref.shape

    @pl.when(jnp.logical_and(i == 0, k == 0))
    def _():
        o_ref[...] = jnp.zeros_like(o_ref)

    @pl.when(k == 0)
    def _():
        acc_ref[...] = jnp.zeros_like(acc_ref)

    # Layer-1 aggregation for this (row block, contraction block); XW1 is a
    # VMEM-resident operand (constant index_map -> fetched once), sliced here.
    k_off = pl.multiple_of(k * tile_k, tile_k)
    acc_ref[...] += jnp.dot(
        a_ref[...], xw_ref[pl.ds(k_off, tile_k), :],
        preferred_element_type=jnp.float32,
    )

    @pl.when(k == pl.num_programs(1) - 1)
    def _():
        # Layer-1 epilogue: bias + ReLU.  F.dropout is identity at inference.
        # TODO(synk): training-mode dropout would use pltpu.prng_seed/prng_random_bits.
        h1 = jnp.maximum(acc_ref[...] + b1_ref[...], 0.0)
        # Fused layer-2 feature transform (W2 resident, bf16 MXU, f32 accumulate).
        h1w2 = jnp.dot(
            h1.astype(jnp.bfloat16), w2_ref[...],
            preferred_element_type=jnp.float32,
        )
        # Reassociated layer-2 aggregation + mean pooling: rank update into the
        # resident pooled accumulator (kept f32 end-to-end for accuracy).
        o_ref[...] += jnp.dot(pa_ref[...], h1w2, preferred_element_type=jnp.float32)


def _fused_call(a_hat_p, xw1_p, b1_p, w2_p, pa_p, tile_m, tile_k):
    n_pad = a_hat_p.shape[0]
    chid_p = xw1_p.shape[1]
    cout_p = w2_p.shape[1]
    g_pad = pa_p.shape[0]
    return pl.pallas_call(
        _fused_gcn_kernel,
        out_shape=jax.ShapeDtypeStruct((g_pad, cout_p), jnp.float32),
        grid_spec=pltpu.PrefetchScalarGridSpec(
            num_scalar_prefetch=0,
            grid=(n_pad // tile_m, n_pad // tile_k),
            in_specs=[
                pl.BlockSpec((tile_m, tile_k), lambda i, k: (i, k)),   # A_hat stream
                pl.BlockSpec((n_pad, chid_p), lambda i, k: (0, 0)),    # XW1 resident
                pl.BlockSpec((1, chid_p), lambda i, k: (0, 0)),        # b1 resident
                pl.BlockSpec((chid_p, cout_p), lambda i, k: (0, 0)),   # W2 resident
                pl.BlockSpec((g_pad, tile_m), lambda i, k: (0, i)),    # PA column panel
            ],
            # Pooled output is resident across the whole grid (accumulated), so the
            # row axis must stay "arbitrary" (read-modify-write).
            out_specs=pl.BlockSpec((g_pad, cout_p), lambda i, k: (0, 0)),
            scratch_shapes=[pltpu.VMEM((tile_m, chid_p), jnp.float32)],
        ),
        compiler_params=pltpu.CompilerParams(
            dimension_semantics=("arbitrary", "arbitrary"),
            vmem_limit_bytes=32 * 1024 * 1024,
        ),
    )(a_hat_p, xw1_p, b1_p, w2_p, pa_p)


# --------------------------------------------------------------------------- #
# Forward wrapper (padding, adaptive tiling, bf16 casts, one pallas_call)
# --------------------------------------------------------------------------- #
def gcnreg_forward(a_hat, x, w1, b1, w2, b2, pool):
    n = x.shape[0]
    c_hid = w1.shape[1]
    c_out = w2.shape[1]
    g = pool.shape[0]

    # Adaptive tiling: collapse the reduction axis for small graphs; for large
    # graphs use 256-row panels with a 1024-wide contraction tile.
    if n <= 1024:
        n_pad = _round_up(n, 256)
        tile_m = min(n_pad, 256)
        tile_k = n_pad
    else:
        n_pad = _round_up(n, 1024)
        tile_m = 256
        tile_k = 1024

    chid_p = _round_up(c_hid, LANE)
    cout_p = _round_up(c_out, LANE)
    g_pad = _round_up(g, 8)

    # X @ W1 is tiny -> let XLA compute it once; no lane-padding of c_in, no extra
    # kernel launch, and the bf16 result becomes a VMEM-resident kernel operand.
    xw1 = x.astype(jnp.float32) @ w1.astype(jnp.float32)

    # Reassociated pooling: out = P @ (A_hat @ H1W2) + b2 = (P @ A_hat) @ H1W2 + b2
    # (pool rows sum to 1, so the layer-2 bias commutes with the mean pooling).
    pa = pool.astype(jnp.float32) @ a_hat.astype(jnp.float32)   # [G, N], cheap vs. kernel work

    # Zero-padding is exact: padded A_hat rows/cols, padded PA columns and padded
    # weight rows/cols are zero, so real outputs are unchanged.
    a_p = _pad2d(a_hat, n_pad, n_pad).astype(jnp.bfloat16)
    xw1_p = _pad2d(xw1, n_pad, chid_p).astype(jnp.bfloat16)
    w2_p = _pad2d(w2, chid_p, cout_p).astype(jnp.bfloat16)
    b1_p = _pad2d(b1.reshape(1, -1), 1, chid_p).astype(jnp.float32)
    pa_p = _pad2d(pa, g_pad, n_pad).astype(jnp.float32)

    out_p = _fused_call(a_p, xw1_p, b1_p, w2_p, pa_p, tile_m, tile_k)
    return out_p[:g, :c_out] + b2.reshape(1, -1)


# --------------------------------------------------------------------------- #
# Host-side graph helpers (same semantics as PyG gcn_norm / global_mean_pool)
# --------------------------------------------------------------------------- #
def build_normalized_adjacency(edge_index, num_nodes):
    """Dense D^{-1/2}(A + I)D^{-1/2} (messages src->dst)."""
    src, dst = edge_index[0], edge_index[1]
    adj = jnp.zeros((num_nodes, num_nodes), jnp.float32)
    adj = adj.at[dst, src].add(1.0)
    adj = adj + jnp.eye(num_nodes, dtype=jnp.float32)  # self loops
    deg = adj.sum(axis=1)
    dinv = jnp.where(deg > 0, jax.lax.rsqrt(deg), 0.0)
    return dinv[:, None] * adj * dinv[None, :]


def build_pool_matrix(batch, num_graphs):
    """P[g, i] = 1/|V_g| if batch[i] == g else 0."""
    onehot = (batch[None, :] == jnp.arange(num_graphs)[:, None]).astype(jnp.float32)
    counts = onehot.sum(axis=1, keepdims=True)
    return onehot / jnp.maximum(counts, 1.0)


def glorot(key, shape):
    fan_in, fan_out = shape
    limit = (6.0 / (fan_in + fan_out)) ** 0.5
    return jax.random.uniform(key, shape, jnp.float32, -limit, limit)


if __name__ == "__main__":
    # 3 ring graphs of 200 nodes each -> N=600 (padded to 768), so the fused
    # kernel runs a real multi-row-block grid (3 row panels, collapsed k axis)
    # with the resident pooled-output accumulation exercised across row blocks.
    NODES_PER_GRAPH, G = 200, 3
    N = NODES_PER_GRAPH * G
    C_IN, C_HID, C_OUT = 8, 32, 4

    key = jax.random.PRNGKey(0)
    k_x, k_w1, k_b1, k_w2, k_b2 = jax.random.split(key, 5)

    x = jax.random.normal(k_x, (N, C_IN), jnp.float32)

    edges = []
    for g in range(G):
        base = g * NODES_PER_GRAPH
        for i in range(NODES_PER_GRAPH):
            a, b = base + i, base + (i + 1) % NODES_PER_GRAPH
            edges.append((a, b))
            edges.append((b, a))
    edge_index = jnp.array(edges, dtype=jnp.int32).T  # [2, E]

    batch = jnp.repeat(jnp.arange(G, dtype=jnp.int32), NODES_PER_GRAPH)

    w1 = glorot(k_w1, (C_IN, C_HID))
    b1 = 0.1 * jax.random.normal(k_b1, (1, C_HID), jnp.float32)
    w2 = glorot(k_w2, (C_HID, C_OUT))
    b2 = 0.1 * jax.random.normal(k_b2, (1, C_OUT), jnp.float32)

    a_hat = build_normalized_adjacency(edge_index, N)
    pool = build_pool_matrix(batch, G)

    out = gcnreg_forward(a_hat, x, w1, b1, w2, b2, pool)
    out = jax.block_until_ready(out)

    # Pure-JAX f32 reference (kernel uses bf16 streaming operands -> loose tolerance).
    ref_h1 = jnp.maximum(a_hat @ (x @ w1) + b1, 0.0)
    ref_h2 = a_hat @ (ref_h1 @ w2) + b2
    ref = pool @ ref_h2

    assert out.shape == (G, C_OUT)
    assert jnp.allclose(out, ref, atol=5e-2, rtol=5e-2), (
        f"max abs err {jnp.max(jnp.abs(out - ref))}"
    )

    print("KERNEL_OK")
</pallas_src>

<mosaic_0001>
module attributes {stable_mosaic.version = 11 : i64} {
  func.func @_fused_gcn_kernel(%arg0: i32, %arg1: i32, %arg2: memref<256x768xbf16, #tpu.memory_space<vmem>>, %arg3: memref<768x128xbf16, #tpu.memory_space<vmem>>, %arg4: memref<1x128xf32, #tpu.memory_space<vmem>>, %arg5: memref<128x128xbf16, #tpu.memory_space<vmem>>, %arg6: memref<8x256xf32, #tpu.memory_space<vmem>>, %arg7: memref<8x128xf32, #tpu.memory_space<vmem>>, %arg8: memref<256x128xf32, #tpu.memory_space<vmem>>) attributes {dimension_semantics = [#tpu.dimension_semantics<arbitrary>, #tpu.dimension_semantics<arbitrary>], iteration_bounds = array<i64: 3, 1>, scalar_prefetch = 0 : i64, scratch_operands = 1 : i64, tpu.core_type = #tpu.core_type<tc>, window_params = [{transform_indices = @transform_0, window_bounds = array<i64: 256, 768>}, {pipeline_mode = #tpu.pipeline_mode<synchronous>, transform_indices = @transform_1, window_bounds = array<i64: 768, 128>}, {pipeline_mode = #tpu.pipeline_mode<synchronous>, transform_indices = @transform_2, window_bounds = array<i64: 1, 128>}, {pipeline_mode = #tpu.pipeline_mode<synchronous>, transform_indices = @transform_3, window_bounds = array<i64: 128, 128>}, {transform_indices = @transform_4, window_bounds = array<i64: 8, 256>}, {pipeline_mode = #tpu.pipeline_mode<synchronous>, transform_indices = @transform_5, window_bounds = array<i64: 8, 128>}]} {
    %c0_i32 = arith.constant 0 : i32
    %0 = arith.cmpi eq, %arg0, %c0_i32 : i32
    %c0_i32_0 = arith.constant 0 : i32
    %1 = arith.cmpi eq, %arg1, %c0_i32_0 : i32
    %2 = arith.andi %0, %1 : i1
    %3 = arith.extui %2 : i1 to i32
    %c0_i32_1 = arith.constant 0 : i32
    %4 = arith.cmpi ne, %3, %c0_i32_1 : i32
    scf.if %4 {
      %cst_12 = arith.constant 0.000000e+00 : f32
      %20 = vector.broadcast %cst_12 : f32 to vector<8x128xf32>
      %c0_13 = arith.constant 0 : index
      %c0_14 = arith.constant 0 : index
      %21 = vector.load %arg7[%c0_13, %c0_14] : memref<8x128xf32, #tpu.memory_space<vmem>>, vector<8x128xf32>
      tpu.vector_store %arg7[%c0_13, %c0_14], %20 {strides = array<i32>} : memref<8x128xf32, #tpu.memory_space<vmem>>, vector<8x128xf32>,
    } else {
    }
    %c0_i32_2 = arith.constant 0 : i32
    %5 = arith.cmpi eq, %arg1, %c0_i32_2 : i32
    %6 = arith.extui %5 : i1 to i32
    %c0_i32_3 = arith.constant 0 : i32
    %7 = arith.cmpi ne, %6, %c0_i32_3 : i32
    scf.if %7 {
      %cst_12 = arith.constant 0.000000e+00 : f32
      %20 = vector.broadcast %cst_12 : f32 to vector<256x128xf32>
      %c0_13 = arith.constant 0 : index
      %c0_14 = arith.constant 0 : index
      %21 = vector.load %arg8[%c0_13, %c0_14] : memref<256x128xf32, #tpu.memory_space<vmem>>, vector<256x128xf32>
      tpu.vector_store %arg8[%c0_13, %c0_14], %20 {strides = array<i32>} : memref<256x128xf32, #tpu.memory_space<vmem>>, vector<256x128xf32>,
    } else {
    }
    %c768_i32 = arith.constant 768 : i32
    %8 = arith.muli %arg1, %c768_i32 : i32
    %9 = tpu.assume_multiple %8, 768 : i32
    %c0 = arith.constant 0 : index
    %c0_4 = arith.constant 0 : index
    %10 = vector.load %arg8[%c0, %c0_4] : memref<256x128xf32, #tpu.memory_space<vmem>>, vector<256x128xf32>
    %c0_5 = arith.constant 0 : index
    %c0_6 = arith.constant 0 : index
    %11 = vector.load %arg2[%c0_5, %c0_6] : memref<256x768xbf16, #tpu.memory_space<vmem>>, vector<256x768xbf16>
    %12 = arith.index_cast %9 : i32 to index
    %c0_7 = arith.constant 0 : index
    %13 = vector.load %arg3[%12, %c0_7] : memref<768x128xbf16, #tpu.memory_space<vmem>>, vector<768x128xbf16>
    %cst = arith.constant dense<0.000000e+00> : vector<256x128xf32>
    %14 = tpu.matmul %11, %13, %cst {dimension_numbers = #tpu.dot_dimension_numbers<[1], [0], [0], [1], [0, 0, 1, 1], [], []>} : vector<256x768xbf16>, vector<768x128xbf16>, vector<256x128xf32> -> vector<256x128xf32>
    %15 = arith.addf %10, %14 : vector<256x128xf32>
    %c0_8 = arith.constant 0 : index
    %c0_9 = arith.constant 0 : index
    %16 = vector.load %arg8[%c0_8, %c0_9] : memref<256x128xf32, #tpu.memory_space<vmem>>, vector<256x128xf32>
    tpu.vector_store %arg8[%c0_8, %c0_9], %15 {strides = array<i32>} : memref<256x128xf32, #tpu.memory_space<vmem>>, vector<256x128xf32>,
    %c0_i32_10 = arith.constant 0 : i32
    %17 = arith.cmpi eq, %arg1, %c0_i32_10 : i32
    %18 = arith.extui %17 : i1 to i32
    %c0_i32_11 = arith.constant 0 : i32
    %19 = arith.cmpi ne, %18, %c0_i32_11 : i32
    scf.if %19 {
      %c0_12 = arith.constant 0 : index
      %c0_13 = arith.constant 0 : index
      %20 = vector.load %arg8[%c0_12, %c0_13] : memref<256x128xf32, #tpu.memory_space<vmem>>, vector<256x128xf32>
      %c0_14 = arith.constant 0 : index
      %c0_15 = arith.constant 0 : index
      %21 = vector.load %arg4[%c0_14, %c0_15] : memref<1x128xf32, #tpu.memory_space<vmem>>, vector<1x128xf32>
      %22 = vector.broadcast %21 : vector<1x128xf32> to vector<256x128xf32>
      %23 = arith.addf %20, %22 : vector<256x128xf32>
      %cst_16 = arith.constant 0.000000e+00 : f32
      %24 = vector.broadcast %cst_16 : f32 to vector<256x128xf32>
      %25 = arith.maximumf %23, %24 : vector<256x128xf32>
      %26 = arith.truncf %25 : vector<256x128xf32> to vector<256x128xbf16>
      %c0_17 = arith.constant 0 : index
      %c0_18 = arith.constant 0 : index
      %27 = vector.load %arg5[%c0_17, %c0_18] : memref<128x128xbf16, #tpu.memory_space<vmem>>, vector<128x128xbf16>
      %cst_19 = arith.constant dense<0.000000e+00> : vector<256x128xf32>
      %28 = tpu.matmul %26, %27, %cst_19 {dimension_numbers = #tpu.dot_dimension_numbers<[1], [0], [0], [1], [0, 0, 1, 1], [], []>} : vector<256x128xbf16>, vector<128x128xbf16>, vector<256x128xf32> -> vector<256x128xf32>
      %c0_20 = arith.constant 0 : index
      %c0_21 = arith.constant 0 : index
      %29 = vector.load %arg7[%c0_20, %c0_21] : memref<8x128xf32, #tpu.memory_space<vmem>>, vector<8x128xf32>
      %c0_22 = arith.constant 0 : index
      %c0_23 = arith.constant 0 : index
      %30 = vector.load %arg6[%c0_22, %c0_23] : memref<8x256xf32, #tpu.memory_space<vmem>>, vector<8x256xf32>
      %cst_24 = arith.constant dense<0.000000e+00> : vector<8x128xf32>
      %31 = tpu.matmul %30, %28, %cst_24 {dimension_numbers = #tpu.dot_dimension_numbers<[1], [0], [0], [1], [0, 0, 1, 1], [], []>} : vector<8x256xf32>, vector<256x128xf32>, vector<8x128xf32> -> vector<8x128xf32>
      %32 = arith.addf %29, %31 : vector<8x128xf32>
      %c0_25 = arith.constant 0 : index
      %c0_26 = arith.constant 0 : index
      %33 = vector.load %arg7[%c0_25, %c0_26] : memref<8x128xf32, #tpu.memory_space<vmem>>, vector<8x128xf32>
      tpu.vector_store %arg7[%c0_25, %c0_26], %32 {strides = array<i32>} : memref<8x128xf32, #tpu.memory_space<vmem>>, vector<8x128xf32>,
    } else {
    }
    return
  }
  func.func @transform_0(%arg0: i32, %arg1: i32) -> (i32, i32) {
    %c0_i32 = arith.constant 0 : i32
    return %arg0, %arg1 : i32, i32
  }
  func.func @transform_1(%arg0: i32, %arg1: i32) -> (i32, i32) {
    %c0_i32 = arith.constant 0 : i32
    %c0_i32_0 = arith.constant 0 : i32
    %c0_i32_1 = arith.constant 0 : i32
    return %c0_i32, %c0_i32_0 : i32, i32
  }
  func.func @transform_2(%arg0: i32, %arg1: i32) -> (i32, i32) {
    %c0_i32 = arith.constant 0 : i32
    %c0_i32_0 = arith.constant 0 : i32
    %c0_i32_1 = arith.constant 0 : i32
    return %c0_i32, %c0_i32_0 : i32, i32
  }
  func.func @transform_3(%arg0: i32, %arg1: i32) -> (i32, i32) {
    %c0_i32 = arith.constant 0 : i32
    %c0_i32_0 = arith.constant 0 : i32
    %c0_i32_1 = arith.constant 0 : i32
    return %c0_i32, %c0_i32_0 : i32, i32
  }
  func.func @transform_4(%arg0: i32, %arg1: i32) -> (i32, i32) {
    %c0_i32 = arith.constant 0 : i32
    %c0_i32_0 = arith.constant 0 : i32
    return %c0_i32, %arg0 : i32, i32
  }
  func.func @transform_5(%arg0: i32, %arg1: i32) -> (i32, i32) {
    %c0_i32 = arith.constant 0 : i32
    %c0_i32_0 = arith.constant 0 : i32
    %c0_i32_1 = arith.constant 0 : i32
    return %c0_i32, %c0_i32_0 : i32, i32
  }
}

</mosaic_0001>

<llo_original>
// kernel: tpu_custom_call.1
$region0: #{tpu_custom_call.1}
  #allocation0 [shape = 'u32[]', space=smem, size = 0x4, offset = 0x4, fixed_abs, tag = 'smem constant byte address 0x4 - core index']
  #allocation1 [shape = 'u32[144,128]{1,0:T(1,128)}', space=vmem, size = 0x12000, scoped, tag = 'internal scratch']
  #allocation2 [shape = 'f32[256,128]{1,0:T(8,128)}', space=vmem, size = 0x20000, scoped, tag = 'scratch operand']
  %s0 = inlined_call_operand.hbm [shape: bf16[768,768], index: 0, kind: input, shape index: {}]
  %s1 = inlined_call_operand.hbm [shape: bf16[768,128], index: 1, kind: input, shape index: {}]
  %s2 = inlined_call_operand.hbm [shape: f32[1,128], index: 2, kind: input, shape index: {}]
  %s3 = inlined_call_operand.hbm [shape: bf16[128,128], index: 3, kind: input, shape index: {}]
  %s4 = inlined_call_operand.hbm [shape: f32[8,768], index: 4, kind: input, shape index: {}]
  %s5 = inlined_call_operand.hbm [shape: f32[8,128], index: 5, kind: output, shape index: {}]
  %s6 = sld [smem:[#allocation0]]
  $region85: #{tpu_custom_call.1} parent=0
    _
  %s8 = ssub.s32 1, %s6
  %s9 = scalar_select 0, %s8, %s6
  $region1: #{tpu_custom_call.1} parent=0
    #allocation3 [shape = 'u8[786432]{0}', space=vmem, size = 0xc0000, scoped, tag = 'input window, operand 0']
    #allocation4 [shape = 's32[2]{0}', space=sflag, size = 0x8, scoped, tag = 'scoped memory for tpu_custom_call.1']
    #allocation5 [shape = 's32[2]{0}', space=sflag, size = 0x8, scoped, tag = 'scoped memory for tpu_custom_call.1']
    #allocation6 [shape = 'u8[196608]{0}', space=vmem, size = 0x30000, scoped, tag = 'input window, operand 1, single buffered']
    #allocation7 [shape = 's32[1]{0}', space=sflag, size = 0x4, scoped, tag = 'scoped memory for tpu_custom_call.1']
    #allocation8 [shape = 'u8[512]{0}', space=vmem, size = 0x400, scoped, tag = 'input window, operand 2, single buffered']
    #allocation9 [shape = 'u8[32768]{0}', space=vmem, size = 0x8000, scoped, tag = 'input window, operand 3, single buffered']
    #allocation10 [shape = 's32[1]{0}', space=sflag, size = 0x4, scoped, tag = 'scoped memory for tpu_custom_call.1']
    #allocation11 [shape = 'u8[16384]{0}', space=vmem, size = 0x4000, scoped, tag = 'input window, operand 4']
    #allocation12 [shape = 'u8[4096]{0}', space=vmem, size = 0x1000, scoped, tag = 'output window, operand 0, single buffered']
    %10 = vsyncpa [#allocation4], 0
    %s11 = scalar_lea.sflag [#allocation4], 1
    %12 = vsyncpa %s11, 0
    %13 = vsyncpa [#allocation7], 0
    %14 = vsyncpa [#allocation10], 0
    %15 = vsyncpa [#allocation5], 0
    loop: start=0, step=1, limit=5
    $region2: #{tpu_custom_call.1} parent=1 // loop_pre_header
      _
    $region3: #{tpu_custom_call.1} parent=1 // loop_header
      %s17 = sphi 0, %s21
      %p18 = scmp.ge.s32.totalorder %s17, 5
      %s24 = sphi 0, %s36
      %s25 = sphi 0, %s32
      %s26 = sphi 0, %s24
      %s27 = sphi 0, %s25
      %s28 = sphi 0, %s26
      %s29 = sphi 0, %s27
      %s41 = sphi 0, %s43
      %s44 = sphi 0, %s41
      %s45 = sphi 0, %s44
      %s61 = sphi 0, %s45
      %s65 = sphi 0, %s65
      %s67 = sphi 0, %s65
      %s68 = sphi 0, %s67
      %s82 = sphi 0, %s68
      %s86 = sphi 0, %s86
      %s88 = sphi 0, %s86
      %s89 = sphi 0, %s88
      %s103 = sphi 0, %s89
      %s107 = sphi 0, %s107
      %s109 = sphi 0, %s107
      %s110 = sphi 0, %s109
      %s124 = sphi 0, %s110
      %s130 = sphi 0, %s132
      %s133 = sphi 0, %s130
      %s134 = sphi 0, %s133
      %s150 = sphi 0, %s134
      %s154 = sphi 0, %s154
      %s156 = sphi 0, %s154
      %s157 = sphi 0, %s156
      %s171 = sphi 0, %s157
    $region4: #{tpu_custom_call.1} parent=1 // loop_header_branch
      %20 = sbr.rel (%p18) target = $region8
    $region5: #{tpu_custom_call.1} parent=1 // loop_body
      %s22 = ssub.s32 %s17, 1
      %s23 = ssub.s32 %s17, 2
      %s30 = sadd.s32 1, %s25
      %p31 = scmp.ge.s32.totalorder %s30, 1
      %s32 = scalar_select %p31, 0, %s30
      %s33 = sadd.s32 1, %s24
      %s34 = scalar_select %p31, %s33, %s24
      %p35 = scmp.ge.s32.totalorder %s34, 3
      %s36 = scalar_select %p35, 0, %s34
      %s37 = ssub.s32 %s24, %s36
      %s38 = ssub.s32 %s25, %s32
      %s39 = sor.u32 %s37, %s38
      %p40 = scmp.eq.s32.totalorder %s39, 0
      %s42 = sadd.s32 %s41, 1
      %s43 = scalar_select %p40, %s41, %s42
      %p46 = pneg %p40
      %p47 = scmp.eq.s32.totalorder %s17, 2
      %p48 = por %p46, %p47
      %p49 = scmp.ne.s32.totalorder %s41, %s44
      %p50 = scmp.eq.s32.totalorder %s17, 0
      %p51 = por %p49, %p50
      %p52 = scmp.ne.s32.totalorder %s41, %s44
      %p53 = scmp.eq.s32.totalorder %s22, 2
      %p54 = por %p52, %p53
      %p55 = scmp.ne.s32.totalorder %s44, %s45
      %p56 = scmp.eq.s32.totalorder %s22, 0
      %p57 = por %p55, %p56
      %p58 = scmp.ne.s32.totalorder %s44, %s45
      %p59 = scmp.eq.s32.totalorder %s23, 2
      %p60 = por %p58, %p59
      %p62 = scmp.ne.s32.totalorder %s45, %s61
      %p63 = scmp.eq.s32.totalorder %s23, 0
      %p64 = por %p62, %p63
      %s66 = sadd.s32 %s65, 1
      %p69 = scmp.eq.s32.totalorder %s17, 2
      %p70 = scmp.ne.s32.totalorder %s65, %s67
      %p71 = scmp.eq.s32.totalorder %s17, 0
      %p72 = por %p70, %p71
      %p73 = scmp.ne.s32.totalorder %s65, %s67
      %p74 = scmp.eq.s32.totalorder %s22, 2
      %p75 = por %p73, %p74
      %p76 = scmp.ne.s32.totalorder %s67, %s68
      %p77 = scmp.eq.s32.totalorder %s22, 0
      %p78 = por %p76, %p77
      %p79 = scmp.ne.s32.totalorder %s67, %s68
      %p80 = scmp.eq.s32.totalorder %s23, 2
      %p81 = por %p79, %p80
      %p83 = scmp.ne.s32.totalorder %s68, %s82
      %p84 = scmp.eq.s32.totalorder %s23, 0
      %p85 = por %p83, %p84
      %s87 = sadd.s32 %s86, 1
      %p90 = scmp.eq.s32.totalorder %s17, 2
      %p91 = scmp.ne.s32.totalorder %s86, %s88
      %p92 = scmp.eq.s32.totalorder %s17, 0
      %p93 = por %p91, %p92
      %p94 = scmp.ne.s32.totalorder %s86, %s88
      %p95 = scmp.eq.s32.totalorder %s22, 2
      %p96 = por %p94, %p95
      %p97 = scmp.ne.s32.totalorder %s88, %s89
      %p98 = scmp.eq.s32.totalorder %s22, 0
      %p99 = por %p97, %p98
      %p100 = scmp.ne.s32.totalorder %s88, %s89
      %p101 = scmp.eq.s32.totalorder %s23, 2
      %p102 = por %p100, %p101
      %p104 = scmp.ne.s32.totalorder %s89, %s103
      %p105 = scmp.eq.s32.totalorder %s23, 0
      %p106 = por %p104, %p105
      %s108 = sadd.s32 %s107, 1
      %p111 = scmp.eq.s32.totalorder %s17, 2
      %p112 = scmp.ne.s32.totalorder %s107, %s109
      %p113 = scmp.eq.s32.totalorder %s17, 0
      %p114 = por %p112, %p113
      %p115 = scmp.ne.s32.totalorder %s107, %s109
      %p116 = scmp.eq.s32.totalorder %s22, 2
      %p117 = por %p115, %p116
      %p118 = scmp.ne.s32.totalorder %s109, %s110
      %p119 = scmp.eq.s32.totalorder %s22, 0
      %p120 = por %p118, %p119
      %p121 = scmp.ne.s32.totalorder %s109, %s110
      %p122 = scmp.eq.s32.totalorder %s23, 2
      %p123 = por %p121, %p122
      %p125 = scmp.ne.s32.totalorder %s110, %s124
      %p126 = scmp.eq.s32.totalorder %s23, 0
      %p127 = por %p125, %p126
      %s128 = ssub.s32 %s24, %s36
      %p129 = scmp.eq.s32.totalorder %s128, 0
      %s131 = sadd.s32 %s130, 1
      %s132 = scalar_select %p129, %s130, %s131
      %p135 = pneg %p129
      %p136 = scmp.eq.s32.totalorder %s17, 2
      %p137 = por %p135, %p136
      %p138 = scmp.ne.s32.totalorder %s130, %s133
      %p139 = scmp.eq.s32.totalorder %s17, 0
      %p140 = por %p138, %p139
      %p141 = scmp.ne.s32.totalorder %s130, %s133
      %p142 = scmp.eq.s32.totalorder %s22, 2
      %p143 = por %p141, %p142
      %p144 = scmp.ne.s32.totalorder %s133, %s134
      %p145 = scmp.eq.s32.totalorder %s22, 0
      %p146 = por %p144, %p145
      %p147 = scmp.ne.s32.totalorder %s133, %s134
      %p148 = scmp.eq.s32.totalorder %s23, 2
      %p149 = por %p147, %p148
      %p151 = scmp.ne.s32.totalorder %s134, %s150
      %p152 = scmp.eq.s32.totalorder %s23, 0
      %p153 = por %p151, %p152
      %s155 = sadd.s32 %s154, 1
      %p158 = scmp.eq.s32.totalorder %s17, 2
      %p159 = scmp.ne.s32.totalorder %s154, %s156
      %p160 = scmp.eq.s32.totalorder %s17, 0
      %p161 = por %p159, %p160
      %p162 = scmp.ne.s32.totalorder %s154, %s156
      %p163 = scmp.eq.s32.totalorder %s22, 2
      %p164 = por %p162, %p163
      %p165 = scmp.ne.s32.totalorder %s156, %s157
      %p166 = scmp.eq.s32.totalorder %s22, 0
      %p167 = por %p165, %p166
      %p168 = scmp.ne.s32.totalorder %s156, %s157
      %p169 = scmp.eq.s32.totalorder %s23, 2
      %p170 = por %p168, %p169
      %p172 = scmp.ne.s32.totalorder %s157, %s171
      %p173 = scmp.eq.s32.totalorder %s23, 0
      %p174 = por %p172, %p173
      %p175 = scmp.le.s32.totalorder 1, %s17
      %p176 = scmp.lt.s32.totalorder %s17, 4
      %p177 = pnand %p175, %p176
      %p178 = pneg %p177
      // Predicated region
      $region9: #{tpu_custom_call.1} parent=5 // pred_check
        _
      $region10: #{tpu_custom_call.1} parent=5 // pred_check_branch
        %180 = sbr.rel (%p177) target = $region12
      $region11: #{tpu_custom_call.1} parent=5 // pred_region
        %s181 = ssub.s32 %s17, 1
        // Predicated region
        $region13: #{tpu_custom_call.1} parent=11 // pred_check
          %p182 = pneg %p78
        $region14: #{tpu_custom_call.1} parent=11 // pred_check_branch
          %184 = sbr.rel (%p182) target = $region16
        $region15: #{tpu_custom_call.1} parent=11 // pred_region
          %s186 = ssub.s32 6144, 6144
          %187 = vsyncadd [#allocation7], %s186
          %s188 = sshll.u32 [#allocation6], 4
          %s189 = int_to_ptr.vmem [resolvable:$true] %s188
          %194 = dma.hbm_to_vmem [thread:$0]  %s1, 6144, %s189, [#allocation7], 64, 64, 4
        $region16: #{tpu_custom_call.1} parent=11 // pred_fallthru
          _
        // Predicated region
        $region17: #{tpu_custom_call.1} parent=11 // pred_check
          %p195 = pneg %p99
        $region18: #{tpu_custom_call.1} parent=11 // pred_check_branch
          %197 = sbr.rel (%p195) target = $region20
        $region19: #{tpu_custom_call.1} parent=11 // pred_region
          %s199 = ssub.s32 16, 16
          %200 = vsyncadd [#allocation7], %s199
          %s202 = sshll.u32 [#allocation8], 4
          %s203 = int_to_ptr.vmem [resolvable:$true] %s202
          %205 = dma.hbm_to_vmem [thread:$0]  %s2, 16, %s203, [#allocation7]
        $region20: #{tpu_custom_call.1} parent=11 // pred_fallthru
          _
        // Predicated region
        $region21: #{tpu_custom_call.1} parent=11 // pred_check
          %p206 = pneg %p120
        $region22: #{tpu_custom_call.1} parent=11 // pred_check_branch
          %208 = sbr.rel (%p206) target = $region24
        $region23: #{tpu_custom_call.1} parent=11 // pred_region
          %s210 = ssub.s32 1024, 1024
          %211 = vsyncadd [#allocation10], %s210
          %s212 = sshll.u32 [#allocation9], 4
          %s213 = int_to_ptr.vmem [resolvable:$true] %s212
          %218 = dma.hbm_to_vmem [thread:$0]  %s3, 1024, %s213, [#allocation10], 64, 64, 4
        $region24: #{tpu_custom_call.1} parent=11 // pred_fallthru
          _
      $region12: #{tpu_custom_call.1} parent=5 // pred_fallthru
        _
      %p219 = scmp.lt.s32.totalorder %s17, 3
      // Predicated region
      $region25: #{tpu_custom_call.1} parent=5 // pred_check
        %p220 = pneg %p219
      $region26: #{tpu_custom_call.1} parent=5 // pred_check_branch
        %222 = sbr.rel (%p220) target = $region28
      $region27: #{tpu_custom_call.1} parent=5 // pred_region
        // Predicated region
        $region29: #{tpu_custom_call.1} parent=27 // pred_check
          %p223 = pneg %p51
        $region30: #{tpu_custom_call.1} parent=27 // pred_check_branch
          %225 = sbr.rel (%p223) target = $region32
        $region31: #{tpu_custom_call.1} parent=27 // pred_region
          %s226 = sand.u32 %s17, 1
          %s227 = scalar_lea.sflag [#allocation4], %s226
          %s228 = sand.u32 %s41, 1
          %s229 = smul.addr %s228, 768
          %s230 = scalar_lea.vmem [#allocation3], %s229
          %s231 = smul.u32 32, %s24
          %s232 = smul.u32 6, %s25
          %s234 = ssub.s32 12288, 12288
          %235 = vsyncadd %s227, %s234
          %s236 = smul.addr %s231, 6
          %s237 = sadd.s32 %s232, %s236
          %s238 = smul.addr %s237, 64
          %s239 = scalar_lea.hbm %s0, %s238
          %s240 = sshll.u32 %s230, 4
          %s241 = int_to_ptr.vmem [resolvable:$true] %s240
          %246 = dma.hbm_to_vmem [thread:$0]  %s239, 12288, %s241, %s227, 384, 384, 24
        $region32: #{tpu_custom_call.1} parent=27 // pred_fallthru
          _
        // Predicated region
        $region33: #{tpu_custom_call.1} parent=27 // pred_check
          %p247 = pneg %p140
        $region34: #{tpu_custom_call.1} parent=27 // pred_check_branch
          %249 = sbr.rel (%p247) target = $region36
        $region35: #{tpu_custom_call.1} parent=27 // pred_region
          %s250 = sand.u32 %s17, 1
          %s251 = scalar_lea.sflag [#allocation4], %s250
          %s252 = sand.u32 %s130, 1
          %s253 = smul.addr %s252, 16
          %s254 = scalar_lea.vmem [#allocation11], %s253
          %s255 = smul.u32 2, %s24
          %s257 = ssub.s32 256, 256
          %258 = vsyncadd %s251, %s257
          %s259 = smul.addr %s255, 128
          %s260 = scalar_lea.hbm %s4, %s259
          %s262 = sshll.u32 %s254, 4
          %s263 = int_to_ptr.vmem [resolvable:$true] %s262
          %265 = dma.hbm_to_vmem [thread:$0]  %s260, 256, %s263, %s251
        $region36: #{tpu_custom_call.1} parent=27 // pred_fallthru
          _
      $region28: #{tpu_custom_call.1} parent=5 // pred_fallthru
        _
      %p266 = scmp.le.s32.totalorder 1, %s17
      %p267 = scmp.lt.s32.totalorder %s17, 4
      %p268 = pnand %p266, %p267
      %p269 = pneg %p268
      // Predicated region
      $region37: #{tpu_custom_call.1} parent=5 // pred_check
        _
      $region38: #{tpu_custom_call.1} parent=5 // pred_check_branch
        %271 = sbr.rel (%p268) target = $region40
      $region39: #{tpu_custom_call.1} parent=5 // pred_region
        %s272 = ssub.s32 %s17, 1
        %s273 = sand.u32 %s22, 1
        %s274 = scalar_lea.sflag [#allocation4], %s273
        %s275 = sand.u32 %s44, 1
        %s276 = smul.addr %s275, 768
        %s277 = scalar_lea.vmem [#allocation3], %s276
        // Predicated region
        $region41: #{tpu_custom_call.1} parent=39 // pred_check
          %p278 = pneg %p57
        $region42: #{tpu_custom_call.1} parent=39 // pred_check_branch
          %280 = sbr.rel (%p278) target = $region44
        $region43: #{tpu_custom_call.1} parent=39 // pred_region
          %281 = dma.done %s274, 12288
        $region44: #{tpu_custom_call.1} parent=39 // pred_fallthru
          _
        // Predicated region
        $region45: #{tpu_custom_call.1} parent=39 // pred_check
          %p282 = pneg %p78
        $region46: #{tpu_custom_call.1} parent=39 // pred_check_branch
          %284 = sbr.rel (%p282) target = $region48
        $region47: #{tpu_custom_call.1} parent=39 // pred_region
          %285 = dma.done [#allocation7], 6144
        $region48: #{tpu_custom_call.1} parent=39 // pred_fallthru
          _
        // Predicated region
        $region49: #{tpu_custom_call.1} parent=39 // pred_check
          %p286 = pneg %p99
        $region50: #{tpu_custom_call.1} parent=39 // pred_check_branch
          %288 = sbr.rel (%p286) target = $region52
        $region51: #{tpu_custom_call.1} parent=39 // pred_region
          %289 = dma.done [#allocation7], 16
        $region52: #{tpu_custom_call.1} parent=39 // pred_fallthru
          _
        // Predicated region
        $region53: #{tpu_custom_call.1} parent=39 // pred_check
          %p290 = pneg %p120
        $region54: #{tpu_custom_call.1} parent=39 // pred_check_branch
          %292 = sbr.rel (%p290) target = $region56
        $region55: #{tpu_custom_call.1} parent=39 // pred_region
          %293 = dma.done [#allocation10], 1024
        $region56: #{tpu_custom_call.1} parent=39 // pred_fallthru
          _
        %s294 = sand.u32 %s22, 1
        %s295 = scalar_lea.sflag [#allocation4], %s294
        %s296 = sand.u32 %s133, 1
        %s297 = smul.addr %s296, 16
        %s298 = scalar_lea.vmem [#allocation11], %s297
        // Predicated region
        $region57: #{tpu_custom_call.1} parent=39 // pred_check
          %p299 = pneg %p146
        $region58: #{tpu_custom_call.1} parent=39 // pred_check_branch
          %301 = sbr.rel (%p299) target = $region60
        $region59: #{tpu_custom_call.1} parent=39 // pred_region
          %302 = dma.done %s295, 256
        $region60: #{tpu_custom_call.1} parent=39 // pred_fallthru
          _
        %s303 = sand.u32 %s22, 1
        %s304 = scalar_lea.sflag [#allocation4], %s303
        %s305 = sand.u32 %s44, 1
        %s306 = smul.addr %s305, 768
        %s307 = scalar_lea.vmem [#allocation3], %s306
        %p308 = pneg %p57
        %p309 = pneg %p54
        %p310 = pneg %p78
        %p311 = pneg %p75
        %p312 = pneg %p99
        %p313 = pneg %p96
        %p314 = pneg %p120
        %p315 = pneg %p117
        %s316 = sand.u32 %s22, 1
        %s317 = scalar_lea.sflag [#allocation4], %s316
        %s318 = sand.u32 %s133, 1
        %s319 = smul.addr %s318, 16
        %s320 = scalar_lea.vmem [#allocation11], %s319
        %p321 = pneg %p146
        %p322 = pneg %p143
        %p323 = pneg %p167
        %p324 = pneg %p164
        %s325 = smul.u32 32, %s26
        %s326 = smul.u32 6, %s27
        %s327 = smul.u32 2, %s26
        %p329 = scmp.eq.s32.totalorder %s26, 0
        %p330 = scmp.eq.s32.totalorder %s27, 0
        %p331 = pnand %p329, %p330
        %p332 = pneg %p331
        // Predicated region
        $region61: #{tpu_custom_call.1} parent=39 // pred_check
          _
        $region62: #{tpu_custom_call.1} parent=39 // pred_check_branch
          %334 = sbr.rel (%p331) target = $region64
        $region63: #{tpu_custom_call.1} parent=39 // pred_region
          %335 = vst [vmem:[#allocation12] sm:$0xff] 0.0
        $region64: #{tpu_custom_call.1} parent=39 // pred_fallthru
          _
        // Predicated region
        $region65: #{tpu_custom_call.1} parent=39 // pred_check
          %p336 = pneg %p330
        $region66: #{tpu_custom_call.1} parent=39 // pred_check_branch
          %338 = sbr.rel (%p336) target = $region68
        $region67: #{tpu_custom_call.1} parent=39 // pred_region
          %339 = vst [vmem:[#allocation2] sm:$0xff] 0.0
          %340 = vst [vmem:[#allocation2 + $0x8] sm:$0xff] 0.0
          %341 = vst [vmem:[#allocation2 + $0x10] sm:$0xff] 0.0
          %342 = vst [vmem:[#allocation2 + $0x18] sm:$0xff] 0.0
          %343 = vst [vmem:[#allocation2 + $0x20] sm:$0xff] 0.0
          %344 = vst [vmem:[#allocation2 + $0x28] sm:$0xff] 0.0
          %345 = vst [vmem:[#allocation2 + $0x30] sm:$0xff] 0.0
          %346 = vst [vmem:[#allocation2 + $0x38] sm:$0xff] 0.0
          %347 = vst [vmem:[#allocation2 + $0x40] sm:$0xff] 0.0
          %348 = vst [vmem:[#allocation2 + $0x48] sm:$0xff] 0.0
          %349 = vst [vmem:[#allocation2 + $0x50] sm:$0xff] 0.0
          %350 = vst [vmem:[#allocation2 + $0x58] sm:$0xff] 0.0
          %351 = vst [vmem:[#allocation2 + $0x60] sm:$0xff] 0.0
          %352 = vst [vmem:[#allocation2 + $0x68] sm:$0xff] 0.0
          %353 = vst [vmem:[#allocation2 + $0x70] sm:$0xff] 0.0
          %354 = vst [vmem:[#allocation2 + $0x78] sm:$0xff] 0.0
          %355 = vst [vmem:[#allocation2 + $0x80] sm:$0xff] 0.0
          %356 = vst [vmem:[#allocation2 + $0x88] sm:$0xff] 0.0
          %357 = vst [vmem:[#allocation2 + $0x90] sm:$0xff] 0.0
          %358 = vst [vmem:[#allocation2 + $0x98] sm:$0xff] 0.0
          %359 = vst [vmem:[#allocation2 + $0xa0] sm:$0xff] 0.0
          %360 = vst [vmem:[#allocation2 + $0xa8] sm:$0xff] 0.0
          %361 = vst [vmem:[#allocation2 + $0xb0] sm:$0xff] 0.0
          %362 = vst [vmem:[#allocation2 + $0xb8] sm:$0xff] 0.0
          %363 = vst [vmem:[#allocation2 + $0xc0] sm:$0xff] 0.0
          %364 = vst [vmem:[#allocation2 + $0xc8] sm:$0xff] 0.0
          %365 = vst [vmem:[#allocation2 + $0xd0] sm:$0xff] 0.0
          %366 = vst [vmem:[#allocation2 + $0xd8] sm:$0xff] 0.0
          %367 = vst [vmem:[#allocation2 + $0xe0] sm:$0xff] 0.0
          %368 = vst [vmem:[#allocation2 + $0xe8] sm:$0xff] 0.0
          %369 = vst [vmem:[#allocation2 + $0xf0] sm:$0xff] 0.0
          %370 = vst [vmem:[#allocation2 + $0xf8] sm:$0xff] 0.0
        $region68: #{tpu_custom_call.1} parent=39 // pred_fallthru
          _
        %s371 = smul.u32 %s27, 768
        %v372 = vld [vmem:[#allocation2] sm:$0xff]
        %v373 = vld [vmem:[#allocation2 + $0x8] sm:$0xff]
        %v374 = vld [vmem:[#allocation2 + $0x10] sm:$0xff]
        %v375 = vld [vmem:[#allocation2 + $0x18] sm:$0xff]
        %v376 = vld [vmem:[#allocation2 + $0x20] sm:$0xff]
        %v377 = vld [vmem:[#allocation2 + $0x28] sm:$0xff]
        %v378 = vld [vmem:[#allocation2 + $0x30] sm:$0xff]
        %v379 = vld [vmem:[#allocation2 + $0x38] sm:$0xff]
        %v380 = vld [vmem:[#allocation2 + $0x40] sm:$0xff]
        %v381 = vld [vmem:[#allocation2 + $0x48] sm:$0xff]
        %v382 = vld [vmem:[#allocation2 + $0x50] sm:$0xff]
        %v383 = vld [vmem:[#allocation2 + $0x58] sm:$0xff]
        %v384 = vld [vmem:[#allocation2 + $0x60] sm:$0xff]
        %v385 = vld [vmem:[#allocation2 + $0x68] sm:$0xff]
        %v386 = vld [vmem:[#allocation2 + $0x70] sm:$0xff]
        %v387 = vld [vmem:[#allocation2 + $0x78] sm:$0xff]
        %v388 = vld [vmem:[#allocation2 + $0x80] sm:$0xff]
        %v389 = vld [vmem:[#allocation2 + $0x88] sm:$0xff]
        %v390 = vld [vmem:[#allocation2 + $0x90] sm:$0xff]
        %v391 = vld [vmem:[#allocation2 + $0x98] sm:$0xff]
        %v392 = vld [vmem:[#allocation2 + $0xa0] sm:$0xff]
        %v393 = vld [vmem:[#allocation2 + $0xa8] sm:$0xff]
        %v394 = vld [vmem:[#allocation2 + $0xb0] sm:$0xff]
        %v395 = vld [vmem:[#allocation2 + $0xb8] sm:$0xff]
        %v396 = vld [vmem:[#allocation2 + $0xc0] sm:$0xff]
        %v397 = vld [vmem:[#allocation2 + $0xc8] sm:$0xff]
        %v398 = vld [vmem:[#allocation2 + $0xd0] sm:$0xff]
        %v399 = vld [vmem:[#allocation2 + $0xd8] sm:$0xff]
        %v400 = vld [vmem:[#allocation2 + $0xe0] sm:$0xff]
        %v401 = vld [vmem:[#allocation2 + $0xe8] sm:$0xff]
        %v402 = vld [vmem:[#allocation2 + $0xf0] sm:$0xff]
        %v403 = vld [vmem:[#allocation2 + $0xf8] sm:$0xff]
        %v404 = vld [vmem:[%s277] sm:$0xff]
        %v405 = vld [vmem:[%s277 + $0x8] sm:$0xff]
        %v406 = vld [vmem:[%s277 + $0x10] sm:$0xff]
        %v407 = vld [vmem:[%s277 + $0x18] sm:$0xff]
        %v408 = vld [vmem:[%s277 + $0x20] sm:$0xff]
        %v409 = vld [vmem:[%s277 + $0x28] sm:$0xff]
        %v410 = vld [vmem:[%s277 + $0x30] sm:$0xff]
        %v411 = vld [vmem:[%s277 + $0x38] sm:$0xff]
        %v412 = vld [vmem:[%s277 + $0x40] sm:$0xff]
        %v413 = vld [vmem:[%s277 + $0x48] sm:$0xff]
        %v414 = vld [vmem:[%s277 + $0x50] sm:$0xff]
        %v415 = vld [vmem:[%s277 + $0x58] sm:$0xff]
        %v416 = vld [vmem:[%s277 + $0x60] sm:$0xff]
        %v417 = vld [vmem:[%s277 + $0x68] sm:$0xff]
        %v418 = vld [vmem:[%s277 + $0x70] sm:$0xff]
        %v419 = vld [vmem:[%s277 + $0x78] sm:$0xff]
        %v420 = vld [vmem:[%s277 + $0x80] sm:$0xff]
        %v421 = vld [vmem:[%s277 + $0x88] sm:$0xff]
        %v422 = vld [vmem:[%s277 + $0x90] sm:$0xff]
        %v423 = vld [vmem:[%s277 + $0x98] sm:$0xff]
        %v424 = vld [vmem:[%s277 + $0xa0] sm:$0xff]
        %v425 = vld [vmem:[%s277 + $0xa8] sm:$0xff]
        %v426 = vld [vmem:[%s277 + $0xb0] sm:$0xff]
        %v427 = vld [vmem:[%s277 + $0xb8] sm:$0xff]
        %v428 = vld [vmem:[%s277 + $0xc0] sm:$0xff]
        %v429 = vld [vmem:[%s277 + $0xc8] sm:$0xff]
        %v430 = vld [vmem:[%s277 + $0xd0] sm:$0xff]
        %v431 = vld [vmem:[%s277 + $0xd8] sm:$0xff]
        %v432 = vld [vmem:[%s277 + $0xe0] sm:$0xff]
        %v433 = vld [vmem:[%s277 + $0xe8] sm:$0xff]
        %v434 = vld [vmem:[%s277 + $0xf0] sm:$0xff]
        %v435 = vld [vmem:[%s277 + $0xf8] sm:$0xff]
        %v436 = vld [vmem:[%s277 + $0x100] sm:$0xff]
        %v437 = vld [vmem:[%s277 + $0x108] sm:$0xff]
        %v438 = vld [vmem:[%s277 + $0x110] sm:$0xff]
        %v439 = vld [vmem:[%s277 + $0x118] sm:$0xff]
        %v440 = vld [vmem:[%s277 + $0x120] sm:$0xff]
        %v441 = vld [vmem:[%s277 + $0x128] sm:$0xff]
        %v442 = vld [vmem:[%s277 + $0x130] sm:$0xff]
        %v443 = vld [vmem:[%s277 + $0x138] sm:$0xff]
        %v444 = vld [vmem:[%s277 + $0x140] sm:$0xff]
        %v445 = vld [vmem:[%s277 + $0x148] sm:$0xff]
        %v446 = vld [vmem:[%s277 + $0x150] sm:$0xff]
        %v447 = vld [vmem:[%s277 + $0x158] sm:$0xff]
        %v448 = vld [vmem:[%s277 + $0x160] sm:$0xff]
        %v449 = vld [vmem:[%s277 + $0x168] sm:$0xff]
        %v450 = vld [vmem:[%s277 + $0x170] sm:$0xff]
        %v451 = vld [vmem:[%s277 + $0x178] sm:$0xff]
        %v452 = vld [vmem:[%s277 + $0x180] sm:$0xff]
        %v453 = vld [vmem:[%s277 + $0x188] sm:$0xff]
        %v454 = vld [vmem:[%s277 + $0x190] sm:$0xff]
        %v455 = vld [vmem:[%s277 + $0x198] sm:$0xff]
        %v456 = vld [vmem:[%s277 + $0x1a0] sm:$0xff]
        %v457 = vld [vmem:[%s277 + $0x1a8] sm:$0xff]
        %v458 = vld [vmem:[%s277 + $0x1b0] sm:$0xff]
        %v459 = vld [vmem:[%s277 + $0x1b8] sm:$0xff]
        %v460 = vld [vmem:[%s277 + $0x1c0] sm:$0xff]
        %v461 = vld [vmem:[%s277 + $0x1c8] sm:$0xff]
        %v462 = vld [vmem:[%s277 + $0x1d0] sm:$0xff]
        %v463 = vld [vmem:[%s277 + $0x1d8] sm:$0xff]
        %v464 = vld [vmem:[%s277 + $0x1e0] sm:$0xff]
        %v465 = vld [vmem:[%s277 + $0x1e8] sm:$0xff]
        %v466 = vld [vmem:[%s277 + $0x1f0] sm:$0xff]
        %v467 = vld [vmem:[%s277 + $0x1f8] sm:$0xff]
        %v468 = vld [vmem:[%s277 + $0x200] sm:$0xff]
        %v469 = vld [vmem:[%s277 + $0x208] sm:$0xff]
        %v470 = vld [vmem:[%s277 + $0x210] sm:$0xff]
        %v471 = vld [vmem:[%s277 + $0x218] sm:$0xff]
        %v472 = vld [vmem:[%s277 + $0x220] sm:$0xff]
        %v473 = vld [vmem:[%s277 + $0x228] sm:$0xff]
        %v474 = vld [vmem:[%s277 + $0x230] sm:$0xff]
        %v475 = vld [vmem:[%s277 + $0x238] sm:$0xff]
        %v476 = vld [vmem:[%s277 + $0x240] sm:$0xff]
        %v477 = vld [vmem:[%s277 + $0x248] sm:$0xff]
        %v478 = vld [vmem:[%s277 + $0x250] sm:$0xff]
        %v479 = vld [vmem:[%s277 + $0x258] sm:$0xff]
        %v480 = vld [vmem:[%s277 + $0x260] sm:$0xff]
        %v481 = vld [vmem:[%s277 + $0x268] sm:$0xff]
        %v482 = vld [vmem:[%s277 + $0x270] sm:$0xff]
        %v483 = vld [vmem:[%s277 + $0x278] sm:$0xff]
        %v484 = vld [vmem:[%s277 + $0x280] sm:$0xff]
        %v485 = vld [vmem:[%s277 + $0x288] sm:$0xff]
        %v486 = vld [vmem:[%s277 + $0x290] sm:$0xff]
        %v487 = vld [vmem:[%s277 + $0x298] sm:$0xff]
        %v488 = vld [vmem:[%s277 + $0x2a0] sm:$0xff]
        %v489 = vld [vmem:[%s277 + $0x2a8] sm:$0xff]
        %v490 = vld [vmem:[%s277 + $0x2b0] sm:$0xff]
        %v491 = vld [vmem:[%s277 + $0x2b8] sm:$0xff]
        %v492 = vld [vmem:[%s277 + $0x2c0] sm:$0xff]
        %v493 = vld [vmem:[%s277 + $0x2c8] sm:$0xff]
        %v494 = vld [vmem:[%s277 + $0x2d0] sm:$0xff]
        %v495 = vld [vmem:[%s277 + $0x2d8] sm:$0xff]
        %v496 = vld [vmem:[%s277 + $0x2e0] sm:$0xff]
        %v497 = vld [vmem:[%s277 + $0x2e8] sm:$0xff]
        %v498 = vld [vmem:[%s277 + $0x2f0] sm:$0xff]
        %v499 = vld [vmem:[%s277 + $0x2f8] sm:$0xff]
        %s500 = sshra.s32 %s371, 3
        %s501 = sand.u32 %s371, 7
        %s502 = smul.addr %s500, 4
        %s503 = scalar_lea.vmem [#allocation6], %s502
        %v504 = vld [vmem:[%s503] sm:$0xf]
        %v505 = vld [vmem:[%s503 + $0x4] sm:$0xf]
        %v506 = vld [vmem:[%s503 + $0x8] sm:$0xf]
        %v507 = vld [vmem:[%s503 + $0xc] sm:$0xf]
        %v508 = vld [vmem:[%s503 + $0x10] sm:$0xf]
        %v509 = vld [vmem:[%s503 + $0x14] sm:$0xf]
        %v510 = vld [vmem:[%s503 + $0x18] sm:$0xf]
        %v511 = vld [vmem:[%s503 + $0x1c] sm:$0xf]
        %v512 = vld [vmem:[%s503 + $0x20] sm:$0xf]
        %v513 = vld [vmem:[%s503 + $0x24] sm:$0xf]
        %v514 = vld [vmem:[%s503 + $0x28] sm:$0xf]
        %v515 = vld [vmem:[%s503 + $0x2c] sm:$0xf]
        %v516 = vld [vmem:[%s503 + $0x30] sm:$0xf]
        %v517 = vld [vmem:[%s503 + $0x34] sm:$0xf]
        %v518 = vld [vmem:[%s503 + $0x38] sm:$0xf]
        %v519 = vld [vmem:[%s503 + $0x3c] sm:$0xf]
        %v520 = vld [vmem:[%s503 + $0x40] sm:$0xf]
        %v521 = vld [vmem:[%s503 + $0x44] sm:$0xf]
        %v522 = vld [vmem:[%s503 + $0x48] sm:$0xf]
        %v523 = vld [vmem:[%s503 + $0x4c] sm:$0xf]
        %v524 = vld [vmem:[%s503 + $0x50] sm:$0xf]
        %v525 = vld [vmem:[%s503 + $0x54] sm:$0xf]
        %v526 = vld [vmem:[%s503 + $0x58] sm:$0xf]
        %v527 = vld [vmem:[%s503 + $0x5c] sm:$0xf]
        %v528 = vld [vmem:[%s503 + $0x60] sm:$0xf]
        %v529 = vld [vmem:[%s503 + $0x64] sm:$0xf]
        %v530 = vld [vmem:[%s503 + $0x68] sm:$0xf]
        %v531 = vld [vmem:[%s503 + $0x6c] sm:$0xf]
        %v532 = vld [vmem:[%s503 + $0x70] sm:$0xf]
        %v533 = vld [vmem:[%s503 + $0x74] sm:$0xf]
        %v534 = vld [vmem:[%s503 + $0x78] sm:$0xf]
        %v535 = vld [vmem:[%s503 + $0x7c] sm:$0xf]
        %v536 = vld [vmem:[%s503 + $0x80] sm:$0xf]
        %v537 = vld [vmem:[%s503 + $0x84] sm:$0xf]
        %v538 = vld [vmem:[%s503 + $0x88] sm:$0xf]
        %v539 = vld [vmem:[%s503 + $0x8c] sm:$0xf]
        %v540 = vld [vmem:[%s503 + $0x90] sm:$0xf]
        %v541 = vld [vmem:[%s503 + $0x94] sm:$0xf]
        %v542 = vld [vmem:[%s503 + $0x98] sm:$0xf]
        %v543 = vld [vmem:[%s503 + $0x9c] sm:$0xf]
        %v544 = vld [vmem:[%s503 + $0xa0] sm:$0xf]
        %v545 = vld [vmem:[%s503 + $0xa4] sm:$0xf]
        %v546 = vld [vmem:[%s503 + $0xa8] sm:$0xf]
        %v547 = vld [vmem:[%s503 + $0xac] sm:$0xf]
        %v548 = vld [vmem:[%s503 + $0xb0] sm:$0xf]
        %v549 = vld [vmem:[%s503 + $0xb4] sm:$0xf]
        %v550 = vld [vmem:[%s503 + $0xb8] sm:$0xf]
        %v551 = vld [vmem:[%s503 + $0xbc] sm:$0xf]
        %v552 = vld [vmem:[%s503 + $0xc0] sm:$0xf]
        %v553 = vld [vmem:[%s503 + $0xc4] sm:$0xf]
        %v554 = vld [vmem:[%s503 + $0xc8] sm:$0xf]
        %v555 = vld [vmem:[%s503 + $0xcc] sm:$0xf]
        %v556 = vld [vmem:[%s503 + $0xd0] sm:$0xf]
        %v557 = vld [vmem:[%s503 + $0xd4] sm:$0xf]
        %v558 = vld [vmem:[%s503 + $0xd8] sm:$0xf]
        %v559 = vld [vmem:[%s503 + $0xdc] sm:$0xf]
        %v560 = vld [vmem:[%s503 + $0xe0] sm:$0xf]
        %v561 = vld [vmem:[%s503 + $0xe4] sm:$0xf]
        %v562 = vld [vmem:[%s503 + $0xe8] sm:$0xf]
        %v563 = vld [vmem:[%s503 + $0xec] sm:$0xf]
        %v564 = vld [vmem:[%s503 + $0xf0] sm:$0xf]
        %v565 = vld [vmem:[%s503 + $0xf4] sm:$0xf]
        %v566 = vld [vmem:[%s503 + $0xf8] sm:$0xf]
        %v567 = vld [vmem:[%s503 + $0xfc] sm:$0xf]
        %v568 = vld [vmem:[%s503 + $0x100] sm:$0xf]
        %v569 = vld [vmem:[%s503 + $0x104] sm:$0xf]
        %v570 = vld [vmem:[%s503 + $0x108] sm:$0xf]
        %v571 = vld [vmem:[%s503 + $0x10c] sm:$0xf]
        %v572 = vld [vmem:[%s503 + $0x110] sm:$0xf]
        %v573 = vld [vmem:[%s503 + $0x114] sm:$0xf]
        %v574 = vld [vmem:[%s503 + $0x118] sm:$0xf]
        %v575 = vld [vmem:[%s503 + $0x11c] sm:$0xf]
        %v576 = vld [vmem:[%s503 + $0x120] sm:$0xf]
        %v577 = vld [vmem:[%s503 + $0x124] sm:$0xf]
        %v578 = vld [vmem:[%s503 + $0x128] sm:$0xf]
        %v579 = vld [vmem:[%s503 + $0x12c] sm:$0xf]
        %v580 = vld [vmem:[%s503 + $0x130] sm:$0xf]
        %v581 = vld [vmem:[%s503 + $0x134] sm:$0xf]
        %v582 = vld [vmem:[%s503 + $0x138] sm:$0xf]
        %v583 = vld [vmem:[%s503 + $0x13c] sm:$0xf]
        %v584 = vld [vmem:[%s503 + $0x140] sm:$0xf]
        %v585 = vld [vmem:[%s503 + $0x144] sm:$0xf]
        %v586 = vld [vmem:[%s503 + $0x148] sm:$0xf]
        %v587 = vld [vmem:[%s503 + $0x14c] sm:$0xf]
        %v588 = vld [vmem:[%s503 + $0x150] sm:$0xf]
        %v589 = vld [vmem:[%s503 + $0x154] sm:$0xf]
        %v590 = vld [vmem:[%s503 + $0x158] sm:$0xf]
        %v591 = vld [vmem:[%s503 + $0x15c] sm:$0xf]
        %v592 = vld [vmem:[%s503 + $0x160] sm:$0xf]
        %v593 = vld [vmem:[%s503 + $0x164] sm:$0xf]
        %v594 = vld [vmem:[%s503 + $0x168] sm:$0xf]
        %v595 = vld [vmem:[%s503 + $0x16c] sm:$0xf]
        %v596 = vld [vmem:[%s503 + $0x170] sm:$0xf]
        %v597 = vld [vmem:[%s503 + $0x174] sm:$0xf]
        %v598 = vld [vmem:[%s503 + $0x178] sm:$0xf]
        %v599 = vld [vmem:[%s503 + $0x17c] sm:$0xf]
        %v696 = vunpack.c.l.b16 %v404
        %v697 = vunpack.c.h.b16 %v404
        %v698 = vunpack.c.l.b16 %v405
        %v699 = vunpack.c.h.b16 %v405
        %v700 = vunpack.c.l.b16 %v406
        %v701 = vunpack.c.h.b16 %v406
        %v702 = vunpack.c.l.b16 %v407
        %v703 = vunpack.c.h.b16 %v407
        %v704 = vunpack.c.l.b16 %v408
        %v705 = vunpack.c.h.b16 %v408
        %v706 = vunpack.c.l.b16 %v409
        %v707 = vunpack.c.h.b16 %v409
        %v708 = vunpack.c.l.b16 %v410
        %v709 = vunpack.c.h.b16 %v410
        %v710 = vunpack.c.l.b16 %v411
        %v711 = vunpack.c.h.b16 %v411
        %v712 = vunpack.c.l.b16 %v412
        %v713 = vunpack.c.h.b16 %v412
        %v714 = vunpack.c.l.b16 %v413
        %v715 = vunpack.c.h.b16 %v413
        %v716 = vunpack.c.l.b16 %v414
        %v717 = vunpack.c.h.b16 %v414
        %v718 = vunpack.c.l.b16 %v415
        %v719 = vunpack.c.h.b16 %v415
        %v720 = vunpack.c.l.b16 %v416
        %v721 = vunpack.c.h.b16 %v416
        %v722 = vunpack.c.l.b16 %v417
        %v723 = vunpack.c.h.b16 %v417
        %v724 = vunpack.c.l.b16 %v418
        %v725 = vunpack.c.h.b16 %v418
        %v726 = vunpack.c.l.b16 %v419
        %v727 = vunpack.c.h.b16 %v419
        %v728 = vunpack.c.l.b16 %v420
        %v729 = vunpack.c.h.b16 %v420
        %v730 = vunpack.c.l.b16 %v421
        %v731 = vunpack.c.h.b16 %v421
        %v732 = vunpack.c.l.b16 %v422
        %v733 = vunpack.c.h.b16 %v422
        %v734 = vunpack.c.l.b16 %v423
        %v735 = vunpack.c.h.b16 %v423
        %v736 = vunpack.c.l.b16 %v424
        %v737 = vunpack.c.h.b16 %v424
        %v738 = vunpack.c.l.b16 %v425
        %v739 = vunpack.c.h.b16 %v425
        %v740 = vunpack.c.l.b16 %v426
        %v741 = vunpack.c.h.b16 %v426
        %v742 = vunpack.c.l.b16 %v427
        %v743 = vunpack.c.h.b16 %v427
        %v744 = vunpack.c.l.b16 %v428
        %v745 = vunpack.c.h.b16 %v428
        %v746 = vunpack.c.l.b16 %v429
        %v747 = vunpack.c.h.b16 %v429
        %v748 = vunpack.c.l.b16 %v430
        %v749 = vunpack.c.h.b16 %v430
        %v750 = vunpack.c.l.b16 %v431
        %v751 = vunpack.c.h.b16 %v431
        %v752 = vunpack.c.l.b16 %v432
        %v753 = vunpack.c.h.b16 %v432
        %v754 = vunpack.c.l.b16 %v433
        %v755 = vunpack.c.h.b16 %v433
        %v756 = vunpack.c.l.b16 %v434
        %v757 = vunpack.c.h.b16 %v434
        %v758 = vunpack.c.l.b16 %v435
        %v759 = vunpack.c.h.b16 %v435
        %v760 = vunpack.c.l.b16 %v436
        %v761 = vunpack.c.h.b16 %v436
        %v762 = vunpack.c.l.b16 %v437
        %v763 = vunpack.c.h.b16 %v437
        %v764 = vunpack.c.l.b16 %v438
        %v765 = vunpack.c.h.b16 %v438
        %v766 = vunpack.c.l.b16 %v439
        %v767 = vunpack.c.h.b16 %v439
        %v768 = vunpack.c.l.b16 %v440
        %v769 = vunpack.c.h.b16 %v440
        %v770 = vunpack.c.l.b16 %v441
        %v771 = vunpack.c.h.b16 %v441
        %v772 = vunpack.c.l.b16 %v442
        %v773 = vunpack.c.h.b16 %v442
        %v774 = vunpack.c.l.b16 %v443
        %v775 = vunpack.c.h.b16 %v443
        %v776 = vunpack.c.l.b16 %v444
        %v777 = vunpack.c.h.b16 %v444
        %v778 = vunpack.c.l.b16 %v445
        %v779 = vunpack.c.h.b16 %v445
        %v780 = vunpack.c.l.b16 %v446
        %v781 = vunpack.c.h.b16 %v446
        %v782 = vunpack.c.l.b16 %v447
        %v783 = vunpack.c.h.b16 %v447
        %v784 = vunpack.c.l.b16 %v448
        %v785 = vunpack.c.h.b16 %v448
        %v786 = vunpack.c.l.b16 %v449
        %v787 = vunpack.c.h.b16 %v449
        %v788 = vunpack.c.l.b16 %v450
        %v789 = vunpack.c.h.b16 %v450
        %v790 = vunpack.c.l.b16 %v451
        %v791 = vunpack.c.h.b16 %v451
        %v792 = vunpack.c.l.b16 %v452
        %v793 = vunpack.c.h.b16 %v452
        %v794 = vunpack.c.l.b16 %v453
        %v795 = vunpack.c.h.b16 %v453
        %v796 = vunpack.c.l.b16 %v454
        %v797 = vunpack.c.h.b16 %v454
        %v798 = vunpack.c.l.b16 %v455
        %v799 = vunpack.c.h.b16 %v455
        %v800 = vunpack.c.l.b16 %v456
        %v801 = vunpack.c.h.b16 %v456
        %v802 = vunpack.c.l.b16 %v457
        %v803 = vunpack.c.h.b16 %v457
        %v804 = vunpack.c.l.b16 %v458
        %v805 = vunpack.c.h.b16 %v458
        %v806 = vunpack.c.l.b16 %v459
        %v807 = vunpack.c.h.b16 %v459
        %v808 = vunpack.c.l.b16 %v460
        %v809 = vunpack.c.h.b16 %v460
        %v810 = vunpack.c.l.b16 %v461
        %v811 = vunpack.c.h.b16 %v461
        %v812 = vunpack.c.l.b16 %v462
        %v813 = vunpack.c.h.b16 %v462
        %v814 = vunpack.c.l.b16 %v463
        %v815 = vunpack.c.h.b16 %v463
        %v816 = vunpack.c.l.b16 %v464
        %v817 = vunpack.c.h.b16 %v464
        %v818 = vunpack.c.l.b16 %v465
        %v819 = vunpack.c.h.b16 %v465
        %v820 = vunpack.c.l.b16 %v466
        %v821 = vunpack.c.h.b16 %v466
        %v822 = vunpack.c.l.b16 %v467
        %v823 = vunpack.c.h.b16 %v467
        %v824 = vunpack.c.l.b16 %v468
        %v825 = vunpack.c.h.b16 %v468
        %v826 = vunpack.c.l.b16 %v469
        %v827 = vunpack.c.h.b16 %v469
        %v828 = vunpack.c.l.b16 %v470
        %v829 = vunpack.c.h.b16 %v470
        %v830 = vunpack.c.l.b16 %v471
        %v831 = vunpack.c.h.b16 %v471
        %v832 = vunpack.c.l.b16 %v472
        %v833 = vunpack.c.h.b16 %v472
        %v834 = vunpack.c.l.b16 %v473
        %v835 = vunpack.c.h.b16 %v473
        %v836 = vunpack.c.l.b16 %v474
        %v837 = vunpack.c.h.b16 %v474
        %v838 = vunpack.c.l.b16 %v475
        %v839 = vunpack.c.h.b16 %v475
        %v840 = vunpack.c.l.b16 %v476
        %v841 = vunpack.c.h.b16 %v476
        %v842 = vunpack.c.l.b16 %v477
        %v843 = vunpack.c.h.b16 %v477
        %v844 = vunpack.c.l.b16 %v478
        %v845 = vunpack.c.h.b16 %v478
        %v846 = vunpack.c.l.b16 %v479
        %v847 = vunpack.c.h.b16 %v479
        %v848 = vunpack.c.l.b16 %v480
        %v849 = vunpack.c.h.b16 %v480
        %v850 = vunpack.c.l.b16 %v481
        %v851 = vunpack.c.h.b16 %v481
        %v852 = vunpack.c.l.b16 %v482
        %v853 = vunpack.c.h.b16 %v482
        %v854 = vunpack.c.l.b16 %v483
        %v855 = vunpack.c.h.b16 %v483
        %v856 = vunpack.c.l.b16 %v484
        %v857 = vunpack.c.h.b16 %v484
        %v858 = vunpack.c.l.b16 %v485
        %v859 = vunpack.c.h.b16 %v485
        %v860 = vunpack.c.l.b16 %v486
        %v861 = vunpack.c.h.b16 %v486
        %v862 = vunpack.c.l.b16 %v487
        %v863 = vunpack.c.h.b16 %v487
        %v864 = vunpack.c.l.b16 %v488
        %v865 = vunpack.c.h.b16 %v488
        %v866 = vunpack.c.l.b16 %v489
        %v867 = vunpack.c.h.b16 %v489
        %v868 = vunpack.c.l.b16 %v490
        %v869 = vunpack.c.h.b16 %v490
        %v870 = vunpack.c.l.b16 %v491
        %v871 = vunpack.c.h.b16 %v491
        %v872 = vunpack.c.l.b16 %v492
        %v873 = vunpack.c.h.b16 %v492
        %v874 = vunpack.c.l.b16 %v493
        %v875 = vunpack.c.h.b16 %v493
        %v876 = vunpack.c.l.b16 %v494
        %v877 = vunpack.c.h.b16 %v494
        %v878 = vunpack.c.l.b16 %v495
        %v879 = vunpack.c.h.b16 %v495
        %v880 = vunpack.c.l.b16 %v496
        %v881 = vunpack.c.h.b16 %v496
        %v882 = vunpack.c.l.b16 %v497
        %v883 = vunpack.c.h.b16 %v497
        %v884 = vunpack.c.l.b16 %v498
        %v885 = vunpack.c.h.b16 %v498
        %v886 = vunpack.c.l.b16 %v499
        %v887 = vunpack.c.h.b16 %v499
        %v888 = vpack.c.b16 %v702, %v696
        %v889 = vpack.c.b16 %v703, %v697
        %v890 = vpack.c.b16 %v704, %v698
        %v891 = vpack.c.b16 %v705, %v699
        %v892 = vpack.c.b16 %v706, %v700
        %v893 = vpack.c.b16 %v707, %v701
        %v894 = vpack.c.b16 %v714, %v708
        %v895 = vpack.c.b16 %v715, %v709
        %v896 = vpack.c.b16 %v716, %v710
        %v897 = vpack.c.b16 %v717, %v711
        %v898 = vpack.c.b16 %v718, %v712
        %v899 = vpack.c.b16 %v719, %v713
        %v900 = vpack.c.b16 %v726, %v720
        %v901 = vpack.c.b16 %v727, %v721
        %v902 = vpack.c.b16 %v728, %v722
        %v903 = vpack.c.b16 %v729, %v723
        %v904 = vpack.c.b16 %v730, %v724
        %v905 = vpack.c.b16 %v731, %v725
        %v906 = vpack.c.b16 %v738, %v732
        %v907 = vpack.c.b16 %v739, %v733
        %v908 = vpack.c.b16 %v740, %v734
        %v909 = vpack.c.b16 %v741, %v735
        %v910 = vpack.c.b16 %v742, %v736
        %v911 = vpack.c.b16 %v743, %v737
        %v912 = vpack.c.b16 %v750, %v744
        %v913 = vpack.c.b16 %v751, %v745
        %v914 = vpack.c.b16 %v752, %v746
        %v915 = vpack.c.b16 %v753, %v747
        %v916 = vpack.c.b16 %v754, %v748
        %v917 = vpack.c.b16 %v755, %v749
        %v918 = vpack.c.b16 %v762, %v756
        %v919 = vpack.c.b16 %v763, %v757
        %v920 = vpack.c.b16 %v764, %v758
        %v921 = vpack.c.b16 %v765, %v759
        %v922 = vpack.c.b16 %v766, %v760
        %v923 = vpack.c.b16 %v767, %v761
        %v924 = vpack.c.b16 %v774, %v768
        %v925 = vpack.c.b16 %v775, %v769
        %v926 = vpack.c.b16 %v776, %v770
        %v927 = vpack.c.b16 %v777, %v771
        %v928 = vpack.c.b16 %v778, %v772
        %v929 = vpack.c.b16 %v779, %v773
        %v930 = vpack.c.b16 %v786, %v780
        %v931 = vpack.c.b16 %v787, %v781
        %v932 = vpack.c.b16 %v788, %v782
        %v933 = vpack.c.b16 %v789, %v783
        %v934 = vpack.c.b16 %v790, %v784
        %v935 = vpack.c.b16 %v791, %v785
        %v936 = vpack.c.b16 %v798, %v792
        %v937 = vpack.c.b16 %v799, %v793
        %v938 = vpack.c.b16 %v800, %v794
        %v939 = vpack.c.b16 %v801, %v795
        %v940 = vpack.c.b16 %v802, %v796
        %v941 = vpack.c.b16 %v803, %v797
        %v942 = vpack.c.b16 %v810, %v804
        %v943 = vpack.c.b16 %v811, %v805
        %v944 = vpack.c.b16 %v812, %v806
        %v945 = vpack.c.b16 %v813, %v807
        %v946 = vpack.c.b16 %v814, %v808
        %v947 = vpack.c.b16 %v815, %v809
        %v948 = vpack.c.b16 %v822, %v816
        %v949 = vpack.c.b16 %v823, %v817
        %v950 = vpack.c.b16 %v824, %v818
        %v951 = vpack.c.b16 %v825, %v819
        %v952 = vpack.c.b16 %v826, %v820
        %v953 = vpack.c.b16 %v827, %v821
        %v954 = vpack.c.b16 %v834, %v828
        %v955 = vpack.c.b16 %v835, %v829
        %v956 = vpack.c.b16 %v836, %v830
        %v957 = vpack.c.b16 %v837, %v831
        %v958 = vpack.c.b16 %v838, %v832
        %v959 = vpack.c.b16 %v839, %v833
        %v960 = vpack.c.b16 %v846, %v840
        %v961 = vpack.c.b16 %v847, %v841
        %v962 = vpack.c.b16 %v848, %v842
        %v963 = vpack.c.b16 %v849, %v843
        %v964 = vpack.c.b16 %v850, %v844
        %v965 = vpack.c.b16 %v851, %v845
        %v966 = vpack.c.b16 %v858, %v852
        %v967 = vpack.c.b16 %v859, %v853
        %v968 = vpack.c.b16 %v860, %v854
        %v969 = vpack.c.b16 %v861, %v855
        %v970 = vpack.c.b16 %v862, %v856
        %v971 = vpack.c.b16 %v863, %v857
        %v972 = vpack.c.b16 %v870, %v864
        %v973 = vpack.c.b16 %v871, %v865
        %v974 = vpack.c.b16 %v872, %v866
        %v975 = vpack.c.b16 %v873, %v867
        %v976 = vpack.c.b16 %v874, %v868
        %v977 = vpack.c.b16 %v875, %v869
        %v978 = vpack.c.b16 %v882, %v876
        %v979 = vpack.c.b16 %v883, %v877
        %v980 = vpack.c.b16 %v884, %v878
        %v981 = vpack.c.b16 %v885, %v879
        %v982 = vpack.c.b16 %v886, %v880
        %v983 = vpack.c.b16 %v887, %v881
        %v1176 = vunpack.c.l.b16 %v504
        %v1177 = vunpack.c.l.b16 %v505
        %v1178 = vunpack.c.l.b16 %v506
        %v1179 = vunpack.c.l.b16 %v507
        %v1180 = vunpack.c.l.b16 %v508
        %v1181 = vunpack.c.l.b16 %v509
        %v1182 = vunpack.c.l.b16 %v510
        %v1183 = vunpack.c.l.b16 %v511
        %v1184 = vunpack.c.l.b16 %v512
        %v1185 = vunpack.c.l.b16 %v513
        %v1186 = vunpack.c.l.b16 %v514
        %v1187 = vunpack.c.l.b16 %v515
        %v1188 = vunpack.c.l.b16 %v516
        %v1189 = vunpack.c.l.b16 %v517
        %v1190 = vunpack.c.l.b16 %v518
        %v1191 = vunpack.c.l.b16 %v519
        %v1192 = vunpack.c.l.b16 %v520
        %v1193 = vunpack.c.l.b16 %v521
        %v1194 = vunpack.c.l.b16 %v522
        %v1195 = vunpack.c.l.b16 %v523
        %v1196 = vunpack.c.l.b16 %v524
        %v1197 = vunpack.c.l.b16 %v525
        %v1198 = vunpack.c.l.b16 %v526
        %v1199 = vunpack.c.l.b16 %v527
        %v1200 = vunpack.c.l.b16 %v528
        %v1201 = vunpack.c.l.b16 %v529
        %v1202 = vunpack.c.l.b16 %v530
        %v1203 = vunpack.c.l.b16 %v531
        %v1204 = vunpack.c.l.b16 %v532
        %v1205 = vunpack.c.l.b16 %v533
        %v1206 = vunpack.c.l.b16 %v534
        %v1207 = vunpack.c.l.b16 %v535
        %v1208 = vunpack.c.l.b16 %v536
        %v1209 = vunpack.c.l.b16 %v537
        %v1210 = vunpack.c.l.b16 %v538
        %v1211 = vunpack.c.l.b16 %v539
        %v1212 = vunpack.c.l.b16 %v540
        %v1213 = vunpack.c.l.b16 %v541
        %v1214 = vunpack.c.l.b16 %v542
        %v1215 = vunpack.c.l.b16 %v543
        %v1216 = vunpack.c.l.b16 %v544
        %v1217 = vunpack.c.l.b16 %v545
        %v1218 = vunpack.c.l.b16 %v546
        %v1219 = vunpack.c.l.b16 %v547
        %v1220 = vunpack.c.l.b16 %v548
        %v1221 = vunpack.c.l.b16 %v549
        %v1222 = vunpack.c.l.b16 %v550
        %v1223 = vunpack.c.l.b16 %v551
        %v1224 = vunpack.c.l.b16 %v552
        %v1225 = vunpack.c.l.b16 %v553
        %v1226 = vunpack.c.l.b16 %v554
        %v1227 = vunpack.c.l.b16 %v555
        %v1228 = vunpack.c.l.b16 %v556
        %v1229 = vunpack.c.l.b16 %v557
        %v1230 = vunpack.c.l.b16 %v558
        %v1231 = vunpack.c.l.b16 %v559
        %v1232 = vunpack.c.l.b16 %v560
        %v1233 = vunpack.c.l.b16 %v561
        %v1234 = vunpack.c.l.b16 %v562
        %v1235 = vunpack.c.l.b16 %v563
        %v1236 = vunpack.c.l.b16 %v564
        %v1237 = vunpack.c.l.b16 %v565
        %v1238 = vunpack.c.l.b16 %v566
        %v1239 = vunpack.c.l.b16 %v567
        %v1240 = vunpack.c.l.b16 %v568
        %v1241 = vunpack.c.l.b16 %v569
        %v1242 = vunpack.c.l.b16 %v570
        %v1243 = vunpack.c.l.b16 %v571
        %v1244 = vunpack.c.l.b16 %v572
        %v1245 = vunpack.c.l.b16 %v573
        %v1246 = vunpack.c.l.b16 %v574
        %v1247 = vunpack.c.l.b16 %v575
        %v1248 = vunpack.c.l.b16 %v576
        %v1249 = vunpack.c.l.b16 %v577
        %v1250 = vunpack.c.l.b16 %v578
        %v1251 = vunpack.c.l.b16 %v579
        %v1252 = vunpack.c.l.b16 %v580
        %v1253 = vunpack.c.l.b16 %v581
        %v1254 = vunpack.c.l.b16 %v582
        %v1255 = vunpack.c.l.b16 %v583
        %v1256 = vunpack.c.l.b16 %v584
        %v1257 = vunpack.c.l.b16 %v585
        %v1258 = vunpack.c.l.b16 %v586
        %v1259 = vunpack.c.l.b16 %v587
        %v1260 = vunpack.c.l.b16 %v588
        %v1261 = vunpack.c.l.b16 %v589
        %v1262 = vunpack.c.l.b16 %v590
        %v1263 = vunpack.c.l.b16 %v591
        %v1264 = vunpack.c.l.b16 %v592
        %v1265 = vunpack.c.l.b16 %v593
        %v1266 = vunpack.c.l.b16 %v594
        %v1267 = vunpack.c.l.b16 %v595
        %v1268 = vunpack.c.l.b16 %v596
        %v1269 = vunpack.c.l.b16 %v597
        %v1270 = vunpack.c.l.b16 %v598
        %v1271 = vunpack.c.l.b16 %v599
        %v1272 = vpack.c.b16 %v1177, %v1176
        %v1273 = vpack.c.b16 %v1179, %v1178
        %v1274 = vpack.c.b16 %v1181, %v1180
        %v1275 = vpack.c.b16 %v1183, %v1182
        %v1276 = vpack.c.b16 %v1185, %v1184
        %v1277 = vpack.c.b16 %v1187, %v1186
        %v1278 = vpack.c.b16 %v1189, %v1188
        %v1279 = vpack.c.b16 %v1191, %v1190
        %v1280 = vpack.c.b16 %v1193, %v1192
        %v1281 = vpack.c.b16 %v1195, %v1194
        %v1282 = vpack.c.b16 %v1197, %v1196
        %v1283 = vpack.c.b16 %v1199, %v1198
        %v1284 = vpack.c.b16 %v1201, %v1200
        %v1285 = vpack.c.b16 %v1203, %v1202
        %v1286 = vpack.c.b16 %v1205, %v1204
        %v1287 = vpack.c.b16 %v1207, %v1206
        %v1288 = vpack.c.b16 %v1209, %v1208
        %v1289 = vpack.c.b16 %v1211, %v1210
        %v1290 = vpack.c.b16 %v1213, %v1212
        %v1291 = vpack.c.b16 %v1215, %v1214
        %v1292 = vpack.c.b16 %v1217, %v1216
        %v1293 = vpack.c.b16 %v1219, %v1218
        %v1294 = vpack.c.b16 %v1221, %v1220
        %v1295 = vpack.c.b16 %v1223, %v1222
        %v1296 = vpack.c.b16 %v1225, %v1224
        %v1297 = vpack.c.b16 %v1227, %v1226
        %v1298 = vpack.c.b16 %v1229, %v1228
        %v1299 = vpack.c.b16 %v1231, %v1230
        %v1300 = vpack.c.b16 %v1233, %v1232
        %v1301 = vpack.c.b16 %v1235, %v1234
        %v1302 = vpack.c.b16 %v1237, %v1236
        %v1303 = vpack.c.b16 %v1239, %v1238
        %v1304 = vpack.c.b16 %v1241, %v1240
        %v1305 = vpack.c.b16 %v1243, %v1242
        %v1306 = vpack.c.b16 %v1245, %v1244
        %v1307 = vpack.c.b16 %v1247, %v1246
        %v1308 = vpack.c.b16 %v1249, %v1248
        %v1309 = vpack.c.b16 %v1251, %v1250
        %v1310 = vpack.c.b16 %v1253, %v1252
        %v1311 = vpack.c.b16 %v1255, %v1254
        %v1312 = vpack.c.b16 %v1257, %v1256
        %v1313 = vpack.c.b16 %v1259, %v1258
        %v1314 = vpack.c.b16 %v1261, %v1260
        %v1315 = vpack.c.b16 %v1263, %v1262
        %v1316 = vpack.c.b16 %v1265, %v1264
        %v1317 = vpack.c.b16 %v1267, %v1266
        %v1318 = vpack.c.b16 %v1269, %v1268
        %v1319 = vpack.c.b16 %v1271, %v1270
        %1368 = vmatprep.subr.bf16.mxu0 0
        %1369 = vmatpush1.bf16.msra.mxu0 %v1272
        %1370 = vmatprep.subr.bf16.mxu0 0
        %1371 = vmatpush1.bf16.msra.mxu0 %v1273
        %1372 = vmatprep.subr.bf16.mxu0 0
        %1373 = vmatpush1.bf16.msra.mxu0 %v1274
        %1374 = vmatprep.subr.bf16.mxu0 0
        %1375 = vmatpush1.bf16.msra.mxu0 %v1275
        %1376 = vmatprep.subr.bf16.mxu0 0
        %1377 = vmatpush1.bf16.msra.mxu0 %v1276
        %1378 = vmatprep.subr.bf16.mxu0 0
        %1379 = vmatpush1.bf16.msra.mxu0 %v1277
        %1380 = vmatprep.subr.bf16.mxu0 0
        %1381 = vmatpush1.bf16.msra.mxu0 %v1278
        %1382 = vmatprep.subr.bf16.mxu0 0
        %1383 = vmatpush1.bf16.msra.mxu0 %v1279
        %1384 = vmatprep.subr.bf16.mxu0 0
        %1385 = vmatpush1.bf16.msra.mxu0 %v1280
        %1386 = vmatprep.subr.bf16.mxu0 0
        %1387 = vmatpush1.bf16.msra.mxu0 %v1281
        %1388 = vmatprep.subr.bf16.mxu0 0
        %1389 = vmatpush1.bf16.msra.mxu0 %v1282
        %1390 = vmatprep.subr.bf16.mxu0 0
        %1391 = vmatpush1.bf16.msra.mxu0 %v1283
        %1392 = vmatprep.subr.bf16.mxu0 0
        %1393 = vmatpush1.bf16.msra.mxu0 %v1284
        %1394 = vmatprep.subr.bf16.mxu0 0
        %1395 = vmatpush1.bf16.msra.mxu0 %v1285
        %1396 = vmatprep.subr.bf16.mxu0 0
        %1397 = vmatpush1.bf16.msra.mxu0 %v1286
        %1398 = vmatprep.subr.bf16.mxu0 0
        %1399 = vmatpush1.bf16.msra.mxu0 %v1287
        %1400 = vmatprep.mubr.bf16.mxu0 %v889
        %1401 = vmatmul.mubr.bf16.gmra.mrb[0].mxu0 %v888
        %v1402 = vpop.f32.mrb[0].mxu0
        %v1403 = vadd.f32 0.0, %v1402
        %v1404 = vpop.f32.mrb[0].mxu0
        %v1405 = vpop.f32.mrb[0].mxu0
        %v1406 = vadd.f32 0.0, %v1405
        %v1407 = vpop.f32.mrb[0].mxu0
        %1408 = vmatprep.mubr.bf16.mxu0 %v895
        %1409 = vmatmul.mubr.bf16.gmra.mrb[0].mxu0 %v894
        %v1410 = vpop.f32.mrb[0].mxu0
        %v1411 = vadd.f32 0.0, %v1410
        %v1412 = vpop.f32.mrb[0].mxu0
        %v1413 = vpop.f32.mrb[0].mxu0
        %v1414 = vadd.f32 0.0, %v1413
        %v1415 = vpop.f32.mrb[0].mxu0
        %1416 = vmatprep.mubr.bf16.mxu0 %v901
        %1417 = vmatmul.mubr.bf16.gmra.mrb[0].mxu0 %v900
        %v1418 = vpop.f32.mrb[0].mxu0
        %v1419 = vadd.f32 0.0, %v1418
        %v1420 = vpop.f32.mrb[0].mxu0
        %v1421 = vpop.f32.mrb[0].mxu0
        %v1422 = vadd.f32 0.0, %v1421
        %v1423 = vpop.f32.mrb[0].mxu0
        %1424 = vmatprep.mubr.bf16.mxu0 %v907
        %1425 = vmatmul.mubr.bf16.gmra.mrb[0].mxu0 %v906
        %v1426 = vpop.f32.mrb[0].mxu0
        %v1427 = vadd.f32 0.0, %v1426
        %v1428 = vpop.f32.mrb[0].mxu0
        %v1429 = vpop.f32.mrb[0].mxu0
        %v1430 = vadd.f32 0.0, %v1429
        %v1431 = vpop.f32.mrb[0].mxu0
        %1432 = vmatprep.mubr.bf16.mxu0 %v913
        %1433 = vmatmul.mubr.bf16.gmra.mrb[0].mxu0 %v912
        %v1434 = vpop.f32.mrb[0].mxu0
        %v1435 = vadd.f32 0.0, %v1434
        %v1436 = vpop.f32.mrb[0].mxu0
        %v1437 = vpop.f32.mrb[0].mxu0
        %v1438 = vadd.f32 0.0, %v1437
        %v1439 = vpop.f32.mrb[0].mxu0
        %1440 = vmatprep.mubr.bf16.mxu0 %v919
        %1441 = vmatmul.mubr.bf16.gmra.mrb[0].mxu0 %v918
        %v1442 = vpop.f32.mrb[0].mxu0
        %v1443 = vadd.f32 0.0, %v1442
        %v1444 = vpop.f32.mrb[0].mxu0
        %v1445 = vpop.f32.mrb[0].mxu0
        %v1446 = vadd.f32 0.0, %v1445
        %v1447 = vpop.f32.mrb[0].mxu0
        %1448 = vmatprep.mubr.bf16.mxu0 %v925
        %1449 = vmatmul.mubr.bf16.gmra.mrb[0].mxu0 %v924
        %v1450 = vpop.f32.mrb[0].mxu0
        %v1451 = vadd.f32 0.0, %v1450
        %v1452 = vpop.f32.mrb[0].mxu0
        %v1453 = vpop.f32.mrb[0].mxu0
        %v1454 = vadd.f32 0.0, %v1453
        %v1455 = vpop.f32.mrb[0].mxu0
        %1456 = vmatprep.mubr.bf16.mxu0 %v931
        %1457 = vmatmul.mubr.bf16.gmra.mrb[0].mxu0 %v930
        %v1458 = vpop.f32.mrb[0].mxu0
        %v1459 = vadd.f32 0.0, %v1458
        %v1460 = vpop.f32.mrb[0].mxu0
        %v1461 = vpop.f32.mrb[0].mxu0
        %v1462 = vadd.f32 0.0, %v1461
        %v1463 = vpop.f32.mrb[0].mxu0
        %1464 = vmatprep.mubr.bf16.mxu0 %v937
        %1465 = vmatmul.mubr.bf16.gmra.mrb[0].mxu0 %v936
        %v1466 = vpop.f32.mrb[0].mxu0
        %v1467 = vadd.f32 0.0, %v1466
        %v1468 = vpop.f32.mrb[0].mxu0
        %v1469 = vpop.f32.mrb[0].mxu0
        %v1470 = vadd.f32 0.0, %v1469
        %v1471 = vpop.f32.mrb[0].mxu0
        %1472 = vmatprep.mubr.bf16.mxu0 %v943
        %1473 = vmatmul.mubr.bf16.gmra.mrb[0].mxu0 %v942
        %v1474 = vpop.f32.mrb[0].mxu0
        %v1475 = vadd.f32 0.0, %v1474
        %v1476 = vpop.f32.mrb[0].mxu0
        %v1477 = vpop.f32.mrb[0].mxu0
        %v1478 = vadd.f32 0.0, %v1477
        %v1479 = vpop.f32.mrb[0].mxu0
        %1480 = vmatprep.mubr.bf16.mxu0 %v949
        %1481 = vmatmul.mubr.bf16.gmra.mrb[0].mxu0 %v948
        %v1482 = vpop.f32.mrb[0].mxu0
        %v1483 = vadd.f32 0.0, %v1482
        %v1484 = vpop.f32.mrb[0].mxu0
        %v1485 = vpop.f32.mrb[0].mxu0
        %v1486 = vadd.f32 0.0, %v1485
        %v1487 = vpop.f32.mrb[0].mxu0
        %1488 = vmatprep.mubr.bf16.mxu0 %v955
        %1489 = vmatmul.mubr.bf16.gmra.mrb[0].mxu0 %v954
        %v1490 = vpop.f32.mrb[0].mxu0
        %v1491 = vadd.f32 0.0, %v1490
        %v1492 = vpop.f32.mrb[0].mxu0
        %v1493 = vpop.f32.mrb[0].mxu0
        %v1494 = vadd.f32 0.0, %v1493
        %v1495 = vpop.f32.mrb[0].mxu0
        %1496 = vmatprep.mubr.bf16.mxu0 %v961
        %1497 = vmatmul.mubr.bf16.gmra.mrb[0].mxu0 %v960
        %v1498 = vpop.f32.mrb[0].mxu0
        %v1499 = vadd.f32 0.0, %v1498
        %v1500 = vpop.f32.mrb[0].mxu0
        %v1501 = vpop.f32.mrb[0].mxu0
        %v1502 = vadd.f32 0.0, %v1501
        %v1503 = vpop.f32.mrb[0].mxu0
        %1504 = vmatprep.mubr.bf16.mxu0 %v967
        %1505 = vmatmul.mubr.bf16.gmra.mrb[0].mxu0 %v966
        %v1506 = vpop.f32.mrb[0].mxu0
        %v1507 = vadd.f32 0.0, %v1506
        %v1508 = vpop.f32.mrb[0].mxu0
        %v1509 = vpop.f32.mrb[0].mxu0
        %v1510 = vadd.f32 0.0, %v1509
        %v1511 = vpop.f32.mrb[0].mxu0
        %1512 = vmatprep.mubr.bf16.mxu0 %v973
        %1513 = vmatmul.mubr.bf16.gmra.mrb[0].mxu0 %v972
        %v1514 = vpop.f32.mrb[0].mxu0
        %v1515 = vadd.f32 0.0, %v1514
        %v1516 = vpop.f32.mrb[0].mxu0
        %v1517 = vpop.f32.mrb[0].mxu0
        %v1518 = vadd.f32 0.0, %v1517
        %v1519 = vpop.f32.mrb[0].mxu0
        %1520 = vmatprep.mubr.bf16.mxu0 %v979
        %1521 = vmatmul.mubr.bf16.gmra.mrb[0].mxu0 %v978
        %v1522 = vpop.f32.mrb[0].mxu0
        %v1523 = vadd.f32 0.0, %v1522
        %v1524 = vpop.f32.mrb[0].mxu0
        %v1525 = vpop.f32.mrb[0].mxu0
        %v1526 = vadd.f32 0.0, %v1525
        %v1527 = vpop.f32.mrb[0].mxu0
        %1528 = vdwg.mxu0
        %1529 = vmatprep.subr.bf16.mxu0 0
        %1530 = vmatpush1.bf16.msra.mxu0 %v1288
        %1531 = vmatprep.subr.bf16.mxu0 0
        %1532 = vmatpush1.bf16.msra.mxu0 %v1289
        %1533 = vmatprep.subr.bf16.mxu0 0
        %1534 = vmatpush1.bf16.msra.mxu0 %v1290
        %1535 = vmatprep.subr.bf16.mxu0 0
        %1536 = vmatpush1.bf16.msra.mxu0 %v1291
        %1537 = vmatprep.subr.bf16.mxu0 0
        %1538 = vmatpush1.bf16.msra.mxu0 %v1292
        %1539 = vmatprep.subr.bf16.mxu0 0
        %1540 = vmatpush1.bf16.msra.mxu0 %v1293
        %1541 = vmatprep.subr.bf16.mxu0 0
        %1542 = vmatpush1.bf16.msra.mxu0 %v1294
        %1543 = vmatprep.subr.bf16.mxu0 0
        %1544 = vmatpush1.bf16.msra.mxu0 %v1295
        %1545 = vmatprep.subr.bf16.mxu0 0
        %1546 = vmatpush1.bf16.msra.mxu0 %v1296
        %1547 = vmatprep.subr.bf16.mxu0 0
        %1548 = vmatpush1.bf16.msra.mxu0 %v1297
        %1549 = vmatprep.subr.bf16.mxu0 0
        %1550 = vmatpush1.bf16.msra.mxu0 %v1298
        %1551 = vmatprep.subr.bf16.mxu0 0
        %1552 = vmatpush1.bf16.msra.mxu0 %v1299
        %1553 = vmatprep.subr.bf16.mxu0 0
        %1554 = vmatpush1.bf16.msra.mxu0 %v1300
        %1555 = vmatprep.subr.bf16.mxu0 0
        %1556 = vmatpush1.bf16.msra.mxu0 %v1301
        %1557 = vmatprep.subr.bf16.mxu0 0
        %1558 = vmatpush1.bf16.msra.mxu0 %v1302
        %1559 = vmatprep.subr.bf16.mxu0 0
        %1560 = vmatpush1.bf16.msra.mxu0 %v1303
        %1561 = vmatprep.mubr.bf16.mxu0 %v891
        %1562 = vmatmul.mubr.bf16.gmra.mrb[0].mxu0 %v890
        %v1563 = vpop.f32.mrb[0].mxu0
        %v1564 = vadd.f32 %v1403, %v1563
        %v1565 = vpop.f32.mrb[0].mxu0
        %v1566 = vpop.f32.mrb[0].mxu0
        %v1567 = vadd.f32 %v1406, %v1566
        %v1568 = vpop.f32.mrb[0].mxu0
        %1569 = vmatprep.mubr.bf16.mxu0 %v897
        %1570 = vmatmul.mubr.bf16.gmra.mrb[0].mxu0 %v896
        %v1571 = vpop.f32.mrb[0].mxu0
        %v1572 = vadd.f32 %v1411, %v1571
        %v1573 = vpop.f32.mrb[0].mxu0
        %v1574 = vpop.f32.mrb[0].mxu0
        %v1575 = vadd.f32 %v1414, %v1574
        %v1576 = vpop.f32.mrb[0].mxu0
        %1577 = vmatprep.mubr.bf16.mxu0 %v903
        %1578 = vmatmul.mubr.bf16.gmra.mrb[0].mxu0 %v902
        %v1579 = vpop.f32.mrb[0].mxu0
        %v1580 = vadd.f32 %v1419, %v1579
        %v1581 = vpop.f32.mrb[0].mxu0
        %v1582 = vpop.f32.mrb[0].mxu0
        %v1583 = vadd.f32 %v1422, %v1582
        %v1584 = vpop.f32.mrb[0].mxu0
        %1585 = vmatprep.mubr.bf16.mxu0 %v909
        %1586 = vmatmul.mubr.bf16.gmra.mrb[0].mxu0 %v908
        %v1587 = vpop.f32.mrb[0].mxu0
        %v1588 = vadd.f32 %v1427, %v1587
        %v1589 = vpop.f32.mrb[0].mxu0
        %v1590 = vpop.f32.mrb[0].mxu0
        %v1591 = vadd.f32 %v1430, %v1590
        %v1592 = vpop.f32.mrb[0].mxu0
        %1593 = vmatprep.mubr.bf16.mxu0 %v915
        %1594 = vmatmul.mubr.bf16.gmra.mrb[0].mxu0 %v914
        %v1595 = vpop.f32.mrb[0].mxu0
        %v1596 = vadd.f32 %v1435, %v1595
        %v1597 = vpop.f32.mrb[0].mxu0
        %v1598 = vpop.f32.mrb[0].mxu0
        %v1599 = vadd.f32 %v1438, %v1598
        %v1600 = vpop.f32.mrb[0].mxu0
        %1601 = vmatprep.mubr.bf16.mxu0 %v921
        %1602 = vmatmul.mubr.bf16.gmra.mrb[0].mxu0 %v920
        %v1603 = vpop.f32.mrb[0].mxu0
        %v1604 = vadd.f32 %v1443, %v1603
        %v1605 = vpop.f32.mrb[0].mxu0
        %v1606 = vpop.f32.mrb[0].mxu0
        %v1607 = vadd.f32 %v1446, %v1606
        %v1608 = vpop.f32.mrb[0].mxu0
        %1609 = vmatprep.mubr.bf16.mxu0 %v927
        %1610 = vmatmul.mubr.bf16.gmra.mrb[0].mxu0 %v926
        %v1611 = vpop.f32.mrb[0].mxu0
        %v1612 = vadd.f32 %v1451, %v1611
        %v1613 = vpop.f32.mrb[0].mxu0
        %v1614 = vpop.f32.mrb[0].mxu0
        %v1615 = vadd.f32 %v1454, %v1614
        %v1616 = vpop.f32.mrb[0].mxu0
        %1617 = vmatprep.mubr.bf16.mxu0 %v933
        %1618 = vmatmul.mubr.bf16.gmra.mrb[0].mxu0 %v932
        %v1619 = vpop.f32.mrb[0].mxu0
        %v1620 = vadd.f32 %v1459, %v1619
        %v1621 = vpop.f32.mrb[0].mxu0
        %v1622 = vpop.f32.mrb[0].mxu0
        %v1623 = vadd.f32 %v1462, %v1622
        %v1624 = vpop.f32.mrb[0].mxu0
        %1625 = vmatprep.mubr.bf16.mxu0 %v939
        %1626 = vmatmul.mubr.bf16.gmra.mrb[0].mxu0 %v938
        %v1627 = vpop.f32.mrb[0].mxu0
        %v1628 = vadd.f32 %v1467, %v1627
        %v1629 = vpop.f32.mrb[0].mxu0
        %v1630 = vpop.f32.mrb[0].mxu0
        %v1631 = vadd.f32 %v1470, %v1630
        %v1632 = vpop.f32.mrb[0].mxu0
        %1633 = vmatprep.mubr.bf16.mxu0 %v945
        %1634 = vmatmul.mubr.bf16.gmra.mrb[0].mxu0 %v944
        %v1635 = vpop.f32.mrb[0].mxu0
        %v1636 = vadd.f32 %v1475, %v1635
        %v1637 = vpop.f32.mrb[0].mxu0
        %v1638 = vpop.f32.mrb[0].mxu0
        %v1639 = vadd.f32 %v1478, %v1638
        %v1640 = vpop.f32.mrb[0].mxu0
        %1641 = vmatprep.mubr.bf16.mxu0 %v951
        %1642 = vmatmul.mubr.bf16.gmra.mrb[0].mxu0 %v950
        %v1643 = vpop.f32.mrb[0].mxu0
        %v1644 = vadd.f32 %v1483, %v1643
        %v1645 = vpop.f32.mrb[0].mxu0
        %v1646 = vpop.f32.mrb[0].mxu0
        %v1647 = vadd.f32 %v1486, %v1646
        %v1648 = vpop.f32.mrb[0].mxu0
        %1649 = vmatprep.mubr.bf16.mxu0 %v957
        %1650 = vmatmul.mubr.bf16.gmra.mrb[0].mxu0 %v956
        %v1651 = vpop.f32.mrb[0].mxu0
        %v1652 = vadd.f32 %v1491, %v1651
        %v1653 = vpop.f32.mrb[0].mxu0
        %v1654 = vpop.f32.mrb[0].mxu0
        %v1655 = vadd.f32 %v1494, %v1654
        %v1656 = vpop.f32.mrb[0].mxu0
        %1657 = vmatprep.mubr.bf16.mxu0 %v963
        %1658 = vmatmul.mubr.bf16.gmra.mrb[0].mxu0 %v962
        %v1659 = vpop.f32.mrb[0].mxu0
        %v1660 = vadd.f32 %v1499, %v1659
        %v1661 = vpop.f32.mrb[0].mxu0
        %v1662 = vpop.f32.mrb[0].mxu0
        %v1663 = vadd.f32 %v1502, %v1662
        %v1664 = vpop.f32.mrb[0].mxu0
        %1665 = vmatprep.mubr.bf16.mxu0 %v969
        %1666 = vmatmul.mubr.bf16.gmra.mrb[0].mxu0 %v968
        %v1667 = vpop.f32.mrb[0].mxu0
        %v1668 = vadd.f32 %v1507, %v1667
        %v1669 = vpop.f32.mrb[0].mxu0
        %v1670 = vpop.f32.mrb[0].mxu0
        %v1671 = vadd.f32 %v1510, %v1670
        %v1672 = vpop.f32.mrb[0].mxu0
        %1673 = vmatprep.mubr.bf16.mxu0 %v975
        %1674 = vmatmul.mubr.bf16.gmra.mrb[0].mxu0 %v974
        %v1675 = vpop.f32.mrb[0].mxu0
        %v1676 = vadd.f32 %v1515, %v1675
        %v1677 = vpop.f32.mrb[0].mxu0
        %v1678 = vpop.f32.mrb[0].mxu0
        %v1679 = vadd.f32 %v1518, %v1678
        %v1680 = vpop.f32.mrb[0].mxu0
        %1681 = vmatprep.mubr.bf16.mxu0 %v981
        %1682 = vmatmul.mubr.bf16.gmra.mrb[0].mxu0 %v980
        %v1683 = vpop.f32.mrb[0].mxu0
        %v1684 = vadd.f32 %v1523, %v1683
        %v1685 = vpop.f32.mrb[0].mxu0
        %v1686 = vpop.f32.mrb[0].mxu0
        %v1687 = vadd.f32 %v1526, %v1686
        %v1688 = vpop.f32.mrb[0].mxu0
        %1689 = vdwg.mxu0
        %1690 = vmatprep.subr.bf16.mxu0 0
        %1691 = vmatpush1.bf16.msra.mxu0 %v1304
        %1692 = vmatprep.subr.bf16.mxu0 0
        %1693 = vmatpush1.bf16.msra.mxu0 %v1305
        %1694 = vmatprep.subr.bf16.mxu0 0
        %1695 = vmatpush1.bf16.msra.mxu0 %v1306
        %1696 = vmatprep.subr.bf16.mxu0 0
        %1697 = vmatpush1.bf16.msra.mxu0 %v1307
        %1698 = vmatprep.subr.bf16.mxu0 0
        %1699 = vmatpush1.bf16.msra.mxu0 %v1308
        %1700 = vmatprep.subr.bf16.mxu0 0
        %1701 = vmatpush1.bf16.msra.mxu0 %v1309
        %1702 = vmatprep.subr.bf16.mxu0 0
        %1703 = vmatpush1.bf16.msra.mxu0 %v1310
        %1704 = vmatprep.subr.bf16.mxu0 0
        %1705 = vmatpush1.bf16.msra.mxu0 %v1311
        %1706 = vmatprep.subr.bf16.mxu0 0
        %1707 = vmatpush1.bf16.msra.mxu0 %v1312
        %1708 = vmatprep.subr.bf16.mxu0 0
        %1709 = vmatpush1.bf16.msra.mxu0 %v1313
        %1710 = vmatprep.subr.bf16.mxu0 0
        %1711 = vmatpush1.bf16.msra.mxu0 %v1314
        %1712 = vmatprep.subr.bf16.mxu0 0
        %1713 = vmatpush1.bf16.msra.mxu0 %v1315
        %1714 = vmatprep.subr.bf16.mxu0 0
        %1715 = vmatpush1.bf16.msra.mxu0 %v1316
        %1716 = vmatprep.subr.bf16.mxu0 0
        %1717 = vmatpush1.bf16.msra.mxu0 %v1317
        %1718 = vmatprep.subr.bf16.mxu0 0
        %1719 = vmatpush1.bf16.msra.mxu0 %v1318
        %1720 = vmatprep.subr.bf16.mxu0 0
        %1721 = vmatpush1.bf16.msra.mxu0 %v1319
        %1722 = vmatprep.mubr.bf16.mxu0 %v893
        %1723 = vmatmul.mubr.bf16.gmra.mrb[0].mxu0 %v892
        %v1724 = vpop.f32.mrb[0].mxu0
        %v1725 = vadd.f32 %v1564, %v1724
        %v1726 = vpop.f32.mrb[0].mxu0
        %v1727 = vpop.f32.mrb[0].mxu0
        %v1728 = vadd.f32 %v1567, %v1727
        %v1729 = vpop.f32.mrb[0].mxu0
        %1730 = vmatprep.mubr.bf16.mxu0 %v899
        %1731 = vmatmul.mubr.bf16.gmra.mrb[0].mxu0 %v898
        %v1732 = vpop.f32.mrb[0].mxu0
        %v1733 = vadd.f32 %v1572, %v1732
        %v1734 = vpop.f32.mrb[0].mxu0
        %v1735 = vpop.f32.mrb[0].mxu0
        %v1736 = vadd.f32 %v1575, %v1735
        %v1737 = vpop.f32.mrb[0].mxu0
        %1738 = vmatprep.mubr.bf16.mxu0 %v905
        %1739 = vmatmul.mubr.bf16.gmra.mrb[0].mxu0 %v904
        %v1740 = vpop.f32.mrb[0].mxu0
        %v1741 = vadd.f32 %v1580, %v1740
        %v1742 = vpop.f32.mrb[0].mxu0
        %v1743 = vpop.f32.mrb[0].mxu0
        %v1744 = vadd.f32 %v1583, %v1743
        %v1745 = vpop.f32.mrb[0].mxu0
        %1746 = vmatprep.mubr.bf16.mxu0 %v911
        %1747 = vmatmul.mubr.bf16.gmra.mrb[0].mxu0 %v910
        %v1748 = vpop.f32.mrb[0].mxu0
        %v1749 = vadd.f32 %v1588, %v1748
        %v1750 = vpop.f32.mrb[0].mxu0
        %v1751 = vpop.f32.mrb[0].mxu0
        %v1752 = vadd.f32 %v1591, %v1751
        %v1753 = vpop.f32.mrb[0].mxu0
        %1754 = vmatprep.mubr.bf16.mxu0 %v917
        %1755 = vmatmul.mubr.bf16.gmra.mrb[0].mxu0 %v916
        %v1756 = vpop.f32.mrb[0].mxu0
        %v1757 = vadd.f32 %v1596, %v1756
        %v1758 = vpop.f32.mrb[0].mxu0
        %v1759 = vpop.f32.mrb[0].mxu0
        %v1760 = vadd.f32 %v1599, %v1759
        %v1761 = vpop.f32.mrb[0].mxu0
        %1762 = vmatprep.mubr.bf16.mxu0 %v923
        %1763 = vmatmul.mubr.bf16.gmra.mrb[0].mxu0 %v922
        %v1764 = vpop.f32.mrb[0].mxu0
        %v1765 = vadd.f32 %v1604, %v1764
        %v1766 = vpop.f32.mrb[0].mxu0
        %v1767 = vpop.f32.mrb[0].mxu0
        %v1768 = vadd.f32 %v1607, %v1767
        %v1769 = vpop.f32.mrb[0].mxu0
        %1770 = vmatprep.mubr.bf16.mxu0 %v929
        %1771 = vmatmul.mubr.bf16.gmra.mrb[0].mxu0 %v928
        %v1772 = vpop.f32.mrb[0].mxu0
        %v1773 = vadd.f32 %v1612, %v1772
        %v1774 = vpop.f32.mrb[0].mxu0
        %v1775 = vpop.f32.mrb[0].mxu0
        %v1776 = vadd.f32 %v1615, %v1775
        %v1777 = vpop.f32.mrb[0].mxu0
        %1778 = vmatprep.mubr.bf16.mxu0 %v935
        %1779 = vmatmul.mubr.bf16.gmra.mrb[0].mxu0 %v934
        %v1780 = vpop.f32.mrb[0].mxu0
        %v1781 = vadd.f32 %v1620, %v1780
        %v1782 = vpop.f32.mrb[0].mxu0
        %v1783 = vpop.f32.mrb[0].mxu0
        %v1784 = vadd.f32 %v1623, %v1783
        %v1785 = vpop.f32.mrb[0].mxu0
        %1786 = vmatprep.mubr.bf16.mxu0 %v941
        %1787 = vmatmul.mubr.bf16.gmra.mrb[0].mxu0 %v940
        %v1788 = vpop.f32.mrb[0].mxu0
        %v1789 = vadd.f32 %v1628, %v1788
        %v1790 = vpop.f32.mrb[0].mxu0
        %v1791 = vpop.f32.mrb[0].mxu0
        %v1792 = vadd.f32 %v1631, %v1791
        %v1793 = vpop.f32.mrb[0].mxu0
        %1794 = vmatprep.mubr.bf16.mxu0 %v947
        %1795 = vmatmul.mubr.bf16.gmra.mrb[0].mxu0 %v946
        %v1796 = vpop.f32.mrb[0].mxu0
        %v1797 = vadd.f32 %v1636, %v1796
        %v1798 = vpop.f32.mrb[0].mxu0
        %v1799 = vpop.f32.mrb[0].mxu0
        %v1800 = vadd.f32 %v1639, %v1799
        %v1801 = vpop.f32.mrb[0].mxu0
        %1802 = vmatprep.mubr.bf16.mxu0 %v953
        %1803 = vmatmul.mubr.bf16.gmra.mrb[0].mxu0 %v952
        %v1804 = vpop.f32.mrb[0].mxu0
        %v1805 = vadd.f32 %v1644, %v1804
        %v1806 = vpop.f32.mrb[0].mxu0
        %v1807 = vpop.f32.mrb[0].mxu0
        %v1808 = vadd.f32 %v1647, %v1807
        %v1809 = vpop.f32.mrb[0].mxu0
        %1810 = vmatprep.mubr.bf16.mxu0 %v959
        %1811 = vmatmul.mubr.bf16.gmra.mrb[0].mxu0 %v958
        %v1812 = vpop.f32.mrb[0].mxu0
        %v1813 = vadd.f32 %v1652, %v1812
        %v1814 = vpop.f32.mrb[0].mxu0
        %v1815 = vpop.f32.mrb[0].mxu0
        %v1816 = vadd.f32 %v1655, %v1815
        %v1817 = vpop.f32.mrb[0].mxu0
        %1818 = vmatprep.mubr.bf16.mxu0 %v965
        %1819 = vmatmul.mubr.bf16.gmra.mrb[0].mxu0 %v964
        %v1820 = vpop.f32.mrb[0].mxu0
        %v1821 = vadd.f32 %v1660, %v1820
        %v1822 = vpop.f32.mrb[0].mxu0
        %v1823 = vpop.f32.mrb[0].mxu0
        %v1824 = vadd.f32 %v1663, %v1823
        %v1825 = vpop.f32.mrb[0].mxu0
        %1826 = vmatprep.mubr.bf16.mxu0 %v971
        %1827 = vmatmul.mubr.bf16.gmra.mrb[0].mxu0 %v970
        %v1828 = vpop.f32.mrb[0].mxu0
        %v1829 = vadd.f32 %v1668, %v1828
        %v1830 = vpop.f32.mrb[0].mxu0
        %v1831 = vpop.f32.mrb[0].mxu0
        %v1832 = vadd.f32 %v1671, %v1831
        %v1833 = vpop.f32.mrb[0].mxu0
        %1834 = vmatprep.mubr.bf16.mxu0 %v977
        %1835 = vmatmul.mubr.bf16.gmra.mrb[0].mxu0 %v976
        %v1836 = vpop.f32.mrb[0].mxu0
        %v1837 = vadd.f32 %v1676, %v1836
        %v1838 = vpop.f32.mrb[0].mxu0
        %v1839 = vpop.f32.mrb[0].mxu0
        %v1840 = vadd.f32 %v1679, %v1839
        %v1841 = vpop.f32.mrb[0].mxu0
        %1842 = vmatprep.mubr.bf16.mxu0 %v983
        %1843 = vmatmul.mubr.bf16.gmra.mrb[0].mxu0 %v982
        %v1844 = vpop.f32.mrb[0].mxu0
        %v1845 = vadd.f32 %v1684, %v1844
        %v1846 = vpop.f32.mrb[0].mxu0
        %v1847 = vpop.f32.mrb[0].mxu0
        %v1848 = vadd.f32 %v1687, %v1847
        %v1849 = vpop.f32.mrb[0].mxu0
        %1850 = vdwg.mxu0
        %v1851 = vadd.f32 %v372, %v1725
        %v1852 = vadd.f32 %v373, %v1728
        %v1853 = vadd.f32 %v374, %v1733
        %v1854 = vadd.f32 %v375, %v1736
        %v1855 = vadd.f32 %v376, %v1741
        %v1856 = vadd.f32 %v377, %v1744
        %v1857 = vadd.f32 %v378, %v1749
        %v1858 = vadd.f32 %v379, %v1752
        %v1859 = vadd.f32 %v380, %v1757
        %v1860 = vadd.f32 %v381, %v1760
        %v1861 = vadd.f32 %v382, %v1765
        %v1862 = vadd.f32 %v383, %v1768
        %v1863 = vadd.f32 %v384, %v1773
        %v1864 = vadd.f32 %v385, %v1776
        %v1865 = vadd.f32 %v386, %v1781
        %v1866 = vadd.f32 %v387, %v1784
        %v1867 = vadd.f32 %v388, %v1789
        %v1868 = vadd.f32 %v389, %v1792
        %v1869 = vadd.f32 %v390, %v1797
        %v1870 = vadd.f32 %v391, %v1800
        %v1871 = vadd.f32 %v392, %v1805
        %v1872 = vadd.f32 %v393, %v1808
        %v1873 = vadd.f32 %v394, %v1813
        %v1874 = vadd.f32 %v395, %v1816
        %v1875 = vadd.f32 %v396, %v1821
        %v1876 = vadd.f32 %v397, %v1824
        %v1877 = vadd.f32 %v398, %v1829
        %v1878 = vadd.f32 %v399, %v1832
        %v1879 = vadd.f32 %v400, %v1837
        %v1880 = vadd.f32 %v401, %v1840
        %v1881 = vadd.f32 %v402, %v1845
        %v1882 = vadd.f32 %v403, %v1848
        %1883 = vst [vmem:[#allocation2] sm:$0xff] %v1851
        %1884 = vst [vmem:[#allocation2 + $0x8] sm:$0xff] %v1852
        %1885 = vst [vmem:[#allocation2 + $0x10] sm:$0xff] %v1853
        %1886 = vst [vmem:[#allocation2 + $0x18] sm:$0xff] %v1854
        %1887 = vst [vmem:[#allocation2 + $0x20] sm:$0xff] %v1855
        %1888 = vst [vmem:[#allocation2 + $0x28] sm:$0xff] %v1856
        %1889 = vst [vmem:[#allocation2 + $0x30] sm:$0xff] %v1857
        %1890 = vst [vmem:[#allocation2 + $0x38] sm:$0xff] %v1858
        %1891 = vst [vmem:[#allocation2 + $0x40] sm:$0xff] %v1859
        %1892 = vst [vmem:[#allocation2 + $0x48] sm:$0xff] %v1860
        %1893 = vst [vmem:[#allocation2 + $0x50] sm:$0xff] %v1861
        %1894 = vst [vmem:[#allocation2 + $0x58] sm:$0xff] %v1862
        %1895 = vst [vmem:[#allocation2 + $0x60] sm:$0xff] %v1863
        %1896 = vst [vmem:[#allocation2 + $0x68] sm:$0xff] %v1864
        %1897 = vst [vmem:[#allocation2 + $0x70] sm:$0xff] %v1865
        %1898 = vst [vmem:[#allocation2 + $0x78] sm:$0xff] %v1866
        %1899 = vst [vmem:[#allocation2 + $0x80] sm:$0xff] %v1867
        %1900 = vst [vmem:[#allocation2 + $0x88] sm:$0xff] %v1868
        %1901 = vst [vmem:[#allocation2 + $0x90] sm:$0xff] %v1869
        %1902 = vst [vmem:[#allocation2 + $0x98] sm:$0xff] %v1870
        %1903 = vst [vmem:[#allocation2 + $0xa0] sm:$0xff] %v1871
        %1904 = vst [vmem:[#allocation2 + $0xa8] sm:$0xff] %v1872
        %1905 = vst [vmem:[#allocation2 + $0xb0] sm:$0xff] %v1873
        %1906 = vst [vmem:[#allocation2 + $0xb8] sm:$0xff] %v1874
        %1907 = vst [vmem:[#allocation2 + $0xc0] sm:$0xff] %v1875
        %1908 = vst [vmem:[#allocation2 + $0xc8] sm:$0xff] %v1876
        %1909 = vst [vmem:[#allocation2 + $0xd0] sm:$0xff] %v1877
        %1910 = vst [vmem:[#allocation2 + $0xd8] sm:$0xff] %v1878
        %1911 = vst [vmem:[#allocation2 + $0xe0] sm:$0xff] %v1879
        %1912 = vst [vmem:[#allocation2 + $0xe8] sm:$0xff] %v1880
        %1913 = vst [vmem:[#allocation2 + $0xf0] sm:$0xff] %v1881
        %1914 = vst [vmem:[#allocation2 + $0xf8] sm:$0xff] %v1882
        // Predicated region
        $region69: #{tpu_custom_call.1} parent=39 // pred_check
          %p1915 = pneg %p330
        $region70: #{tpu_custom_call.1} parent=39 // pred_check_branch
          %1917 = sbr.rel (%p1915) target = $region72
        $region71: #{tpu_custom_call.1} parent=39 // pred_region
          %v1918 = vld [vmem:[#allocation2] sm:$0xff]
          %v1919 = vld [vmem:[#allocation2 + $0x8] sm:$0xff]
          %v1920 = vld [vmem:[#allocation2 + $0x10] sm:$0xff]
          %v1921 = vld [vmem:[#allocation2 + $0x18] sm:$0xff]
          %v1922 = vld [vmem:[#allocation2 + $0x20] sm:$0xff]
          %v1923 = vld [vmem:[#allocation2 + $0x28] sm:$0xff]
          %v1924 = vld [vmem:[#allocation2 + $0x30] sm:$0xff]
          %v1925 = vld [vmem:[#allocation2 + $0x38] sm:$0xff]
          %v1926 = vld [vmem:[#allocation2 + $0x40] sm:$0xff]
          %v1927 = vld [vmem:[#allocation2 + $0x48] sm:$0xff]
          %v1928 = vld [vmem:[#allocation2 + $0x50] sm:$0xff]
          %v1929 = vld [vmem:[#allocation2 + $0x58] sm:$0xff]
          %v1930 = vld [vmem:[#allocation2 + $0x60] sm:$0xff]
          %v1931 = vld [vmem:[#allocation2 + $0x68] sm:$0xff]
          %v1932 = vld [vmem:[#allocation2 + $0x70] sm:$0xff]
          %v1933 = vld [vmem:[#allocation2 + $0x78] sm:$0xff]
          %v1934 = vld [vmem:[#allocation2 + $0x80] sm:$0xff]
          %v1935 = vld [vmem:[#allocation2 + $0x88] sm:$0xff]
          %v1936 = vld [vmem:[#allocation2 + $0x90] sm:$0xff]
          %v1937 = vld [vmem:[#allocation2 + $0x98] sm:$0xff]
          %v1938 = vld [vmem:[#allocation2 + $0xa0] sm:$0xff]
          %v1939 = vld [vmem:[#allocation2 + $0xa8] sm:$0xff]
          %v1940 = vld [vmem:[#allocation2 + $0xb0] sm:$0xff]
          %v1941 = vld [vmem:[#allocation2 + $0xb8] sm:$0xff]
          %v1942 = vld [vmem:[#allocation2 + $0xc0] sm:$0xff]
          %v1943 = vld [vmem:[#allocation2 + $0xc8] sm:$0xff]
          %v1944 = vld [vmem:[#allocation2 + $0xd0] sm:$0xff]
          %v1945 = vld [vmem:[#allocation2 + $0xd8] sm:$0xff]
          %v1946 = vld [vmem:[#allocation2 + $0xe0] sm:$0xff]
          %v1947 = vld [vmem:[#allocation2 + $0xe8] sm:$0xff]
          %v1948 = vld [vmem:[#allocation2 + $0xf0] sm:$0xff]
          %v1949 = vld [vmem:[#allocation2 + $0xf8] sm:$0xff]
          %v1950 = vld [vmem:[#allocation8] sm:$0x1]
          %v1952 = vlaneseq
          %v1953 = vshrl.u32 %v1952, 7
          %v1954 = vsub.s32 0, %v1953
          %v1955 = vrot.slane %v1950, %v1954
          %v1957 = vadd.f32 %v1918, %v1955
          %v1958 = vadd.f32 %v1919, %v1955
          %v1959 = vadd.f32 %v1920, %v1955
          %v1960 = vadd.f32 %v1921, %v1955
          %v1961 = vadd.f32 %v1922, %v1955
          %v1962 = vadd.f32 %v1923, %v1955
          %v1963 = vadd.f32 %v1924, %v1955
          %v1964 = vadd.f32 %v1925, %v1955
          %v1965 = vadd.f32 %v1926, %v1955
          %v1966 = vadd.f32 %v1927, %v1955
          %v1967 = vadd.f32 %v1928, %v1955
          %v1968 = vadd.f32 %v1929, %v1955
          %v1969 = vadd.f32 %v1930, %v1955
          %v1970 = vadd.f32 %v1931, %v1955
          %v1971 = vadd.f32 %v1932, %v1955
          %v1972 = vadd.f32 %v1933, %v1955
          %v1973 = vadd.f32 %v1934, %v1955
          %v1974 = vadd.f32 %v1935, %v1955
          %v1975 = vadd.f32 %v1936, %v1955
          %v1976 = vadd.f32 %v1937, %v1955
          %v1977 = vadd.f32 %v1938, %v1955
          %v1978 = vadd.f32 %v1939, %v1955
          %v1979 = vadd.f32 %v1940, %v1955
          %v1980 = vadd.f32 %v1941, %v1955
          %v1981 = vadd.f32 %v1942, %v1955
          %v1982 = vadd.f32 %v1943, %v1955
          %v1983 = vadd.f32 %v1944, %v1955
          %v1984 = vadd.f32 %v1945, %v1955
          %v1985 = vadd.f32 %v1946, %v1955
          %v1986 = vadd.f32 %v1947, %v1955
          %v1987 = vadd.f32 %v1948, %v1955
          %v1988 = vadd.f32 %v1949, %v1955
          %v1989 = vmax.f32 %v1957, 0.0
          %v1990 = vmax.f32 %v1958, 0.0
          %v1991 = vmax.f32 %v1959, 0.0
          %v1992 = vmax.f32 %v1960, 0.0
          %v1993 = vmax.f32 %v1961, 0.0
          %v1994 = vmax.f32 %v1962, 0.0
          %v1995 = vmax.f32 %v1963, 0.0
          %v1996 = vmax.f32 %v1964, 0.0
          %v1997 = vmax.f32 %v1965, 0.0
          %v1998 = vmax.f32 %v1966, 0.0
          %v1999 = vmax.f32 %v1967, 0.0
          %v2000 = vmax.f32 %v1968, 0.0
          %v2001 = vmax.f32 %v1969, 0.0
          %v2002 = vmax.f32 %v1970, 0.0
          %v2003 = vmax.f32 %v1971, 0.0
          %v2004 = vmax.f32 %v1972, 0.0
          %v2005 = vmax.f32 %v1973, 0.0
          %v2006 = vmax.f32 %v1974, 0.0
          %v2007 = vmax.f32 %v1975, 0.0
          %v2008 = vmax.f32 %v1976, 0.0
          %v2009 = vmax.f32 %v1977, 0.0
          %v2010 = vmax.f32 %v1978, 0.0
          %v2011 = vmax.f32 %v1979, 0.0
          %v2012 = vmax.f32 %v1980, 0.0
          %v2013 = vmax.f32 %v1981, 0.0
          %v2014 = vmax.f32 %v1982, 0.0
          %v2015 = vmax.f32 %v1983, 0.0
          %v2016 = vmax.f32 %v1984, 0.0
          %v2017 = vmax.f32 %v1985, 0.0
          %v2018 = vmax.f32 %v1986, 0.0
          %v2019 = vmax.f32 %v1987, 0.0
          %v2020 = vmax.f32 %v1988, 0.0
          %v2021 = vpack.c.bf16 %v1990, %v1989
          %v2022 = vpack.c.bf16 %v1992, %v1991
          %v2023 = vpack.c.bf16 %v1994, %v1993
          %v2024 = vpack.c.bf16 %v1996, %v1995
          %v2025 = vpack.c.bf16 %v1998, %v1997
          %v2026 = vpack.c.bf16 %v2000, %v1999
          %v2027 = vpack.c.bf16 %v2002, %v2001
          %v2028 = vpack.c.bf16 %v2004, %v2003
          %v2029 = vpack.c.bf16 %v2006, %v2005
          %v2030 = vpack.c.bf16 %v2008, %v2007
          %v2031 = vpack.c.bf16 %v2010, %v2009
          %v2032 = vpack.c.bf16 %v2012, %v2011
          %v2033 = vpack.c.bf16 %v2014, %v2013
          %v2034 = vpack.c.bf16 %v2016, %v2015
          %v2035 = vpack.c.bf16 %v2018, %v2017
          %v2036 = vpack.c.bf16 %v2020, %v2019
          %v2037 = vld [vmem:[#allocation9] sm:$0xf]
          %v2038 = vld [vmem:[#allocation9 + $0x4] sm:$0xf]
          %v2039 = vld [vmem:[#allocation9 + $0x8] sm:$0xf]
          %v2040 = vld [vmem:[#allocation9 + $0xc] sm:$0xf]
          %v2041 = vld [vmem:[#allocation9 + $0x10] sm:$0xf]
          %v2042 = vld [vmem:[#allocation9 + $0x14] sm:$0xf]
          %v2043 = vld [vmem:[#allocation9 + $0x18] sm:$0xf]
          %v2044 = vld [vmem:[#allocation9 + $0x1c] sm:$0xf]
          %v2045 = vld [vmem:[#allocation9 + $0x20] sm:$0xf]
          %v2046 = vld [vmem:[#allocation9 + $0x24] sm:$0xf]
          %v2047 = vld [vmem:[#allocation9 + $0x28] sm:$0xf]
          %v2048 = vld [vmem:[#allocation9 + $0x2c] sm:$0xf]
          %v2049 = vld [vmem:[#allocation9 + $0x30] sm:$0xf]
          %v2050 = vld [vmem:[#allocation9 + $0x34] sm:$0xf]
          %v2051 = vld [vmem:[#allocation9 + $0x38] sm:$0xf]
          %v2052 = vld [vmem:[#allocation9 + $0x3c] sm:$0xf]
          %v2069 = vunpack.c.l.b16 %v2037
          %v2070 = vunpack.c.l.b16 %v2038
          %v2071 = vunpack.c.l.b16 %v2039
          %v2072 = vunpack.c.l.b16 %v2040
          %v2073 = vunpack.c.l.b16 %v2041
          %v2074 = vunpack.c.l.b16 %v2042
          %v2075 = vunpack.c.l.b16 %v2043
          %v2076 = vunpack.c.l.b16 %v2044
          %v2077 = vunpack.c.l.b16 %v2045
          %v2078 = vunpack.c.l.b16 %v2046
          %v2079 = vunpack.c.l.b16 %v2047
          %v2080 = vunpack.c.l.b16 %v2048
          %v2081 = vunpack.c.l.b16 %v2049
          %v2082 = vunpack.c.l.b16 %v2050
          %v2083 = vunpack.c.l.b16 %v2051
          %v2084 = vunpack.c.l.b16 %v2052
          %v2085 = vpack.c.b16 %v2070, %v2069
          %v2086 = vpack.c.b16 %v2072, %v2071
          %v2087 = vpack.c.b16 %v2074, %v2073
          %v2088 = vpack.c.b16 %v2076, %v2075
          %v2089 = vpack.c.b16 %v2078, %v2077
          %v2090 = vpack.c.b16 %v2080, %v2079
          %v2091 = vpack.c.b16 %v2082, %v2081
          %v2092 = vpack.c.b16 %v2084, %v2083
          %2101 = vmatprep.subr.bf16.mxu0 0
          %2102 = vmatpush1.bf16.msra.mxu0 %v2085
          %2103 = vmatprep.subr.bf16.mxu0 0
          %2104 = vmatpush1.bf16.msra.mxu0 %v2086
          %2105 = vmatprep.subr.bf16.mxu0 0
          %2106 = vmatpush1.bf16.msra.mxu0 %v2087
          %2107 = vmatprep.subr.bf16.mxu0 0
          %2108 = vmatpush1.bf16.msra.mxu0 %v2088
          %2109 = vmatprep.subr.bf16.mxu0 0
          %2110 = vmatpush1.bf16.msra.mxu0 %v2089
          %2111 = vmatprep.subr.bf16.mxu0 0
          %2112 = vmatpush1.bf16.msra.mxu0 %v2090
          %2113 = vmatprep.subr.bf16.mxu0 0
          %2114 = vmatpush1.bf16.msra.mxu0 %v2091
          %2115 = vmatprep.subr.bf16.mxu0 0
          %2116 = vmatpush1.bf16.msra.mxu0 %v2092
          %2117 = vmatprep.subr.bf16.mxu0 0
          %2118 = vmatpush1.bf16.msra.mxu0 0
          %2119 = vmatprep.subr.bf16.mxu0 0
          %2120 = vmatpush1.bf16.msra.mxu0 0
          %2121 = vmatprep.subr.bf16.mxu0 0
          %2122 = vmatpush1.bf16.msra.mxu0 0
          %2123 = vmatprep.subr.bf16.mxu0 0
          %2124 = vmatpush1.bf16.msra.mxu0 0
          %2125 = vmatprep.subr.bf16.mxu0 0
          %2126 = vmatpush1.bf16.msra.mxu0 0
          %2127 = vmatprep.subr.bf16.mxu0 0
          %2128 = vmatpush1.bf16.msra.mxu0 0
          %2129 = vmatprep.subr.bf16.mxu0 0
          %2130 = vmatpush1.bf16.msra.mxu0 0
          %2131 = vmatprep.subr.bf16.mxu0 0
          %2132 = vmatpush1.bf16.msra.mxu0 0
          %2133 = vmatprep.mubr.bf16.mxu0 0
          %2134 = vmatmul.mubr.bf16.gmra.mrb[0].mxu0 %v2021
          %v2135 = vpop.f32.mrb[0].mxu0
          %v2136 = vadd.f32 0.0, %v2135
          %v2137 = vpop.f32.mrb[0].mxu0
          %v2138 = vpop.f32.mrb[0].mxu0
          %v2139 = vadd.f32 0.0, %v2138
          %v2140 = vpop.f32.mrb[0].mxu0
          %2141 = vmatprep.mubr.bf16.mxu0 0
          %2142 = vmatmul.mubr.bf16.gmra.mrb[0].mxu0 %v2022
          %v2143 = vpop.f32.mrb[0].mxu0
          %v2144 = vadd.f32 0.0, %v2143
          %v2145 = vpop.f32.mrb[0].mxu0
          %v2146 = vpop.f32.mrb[0].mxu0
          %v2147 = vadd.f32 0.0, %v2146
          %v2148 = vpop.f32.mrb[0].mxu0
          %2149 = vmatprep.mubr.bf16.mxu0 0
          %2150 = vmatmul.mubr.bf16.gmra.mrb[0].mxu0 %v2023
          %v2151 = vpop.f32.mrb[0].mxu0
          %v2152 = vadd.f32 0.0, %v2151
          %v2153 = vpop.f32.mrb[0].mxu0
          %v2154 = vpop.f32.mrb[0].mxu0
          %v2155 = vadd.f32 0.0, %v2154
          %v2156 = vpop.f32.mrb[0].mxu0
          %2157 = vmatprep.mubr.bf16.mxu0 0
          %2158 = vmatmul.mubr.bf16.gmra.mrb[0].mxu0 %v2024
          %v2159 = vpop.f32.mrb[0].mxu0
          %v2160 = vadd.f32 0.0, %v2159
          %v2161 = vpop.f32.mrb[0].mxu0
          %v2162 = vpop.f32.mrb[0].mxu0
          %v2163 = vadd.f32 0.0, %v2162
          %v2164 = vpop.f32.mrb[0].mxu0
          %2165 = vmatprep.mubr.bf16.mxu0 0
          %2166 = vmatmul.mubr.bf16.gmra.mrb[0].mxu0 %v2025
          %v2167 = vpop.f32.mrb[0].mxu0
          %v2168 = vadd.f32 0.0, %v2167
          %v2169 = vpop.f32.mrb[0].mxu0
          %v2170 = vpop.f32.mrb[0].mxu0
          %v2171 = vadd.f32 0.0, %v2170
          %v2172 = vpop.f32.mrb[0].mxu0
          %2173 = vmatprep.mubr.bf16.mxu0 0
          %2174 = vmatmul.mubr.bf16.gmra.mrb[0].mxu0 %v2026
          %v2175 = vpop.f32.mrb[0].mxu0
          %v2176 = vadd.f32 0.0, %v2175
          %v2177 = vpop.f32.mrb[0].mxu0
          %v2178 = vpop.f32.mrb[0].mxu0
          %v2179 = vadd.f32 0.0, %v2178
          %v2180 = vpop.f32.mrb[0].mxu0
          %2181 = vmatprep.mubr.bf16.mxu0 0
          %2182 = vmatmul.mubr.bf16.gmra.mrb[0].mxu0 %v2027
          %v2183 = vpop.f32.mrb[0].mxu0
          %v2184 = vadd.f32 0.0, %v2183
          %v2185 = vpop.f32.mrb[0].mxu0
          %v2186 = vpop.f32.mrb[0].mxu0
          %v2187 = vadd.f32 0.0, %v2186
          %v2188 = vpop.f32.mrb[0].mxu0
          %2189 = vmatprep.mubr.bf16.mxu0 0
          %2190 = vmatmul.mubr.bf16.gmra.mrb[0].mxu0 %v2028
          %v2191 = vpop.f32.mrb[0].mxu0
          %v2192 = vadd.f32 0.0, %v2191
          %v2193 = vpop.f32.mrb[0].mxu0
          %v2194 = vpop.f32.mrb[0].mxu0
          %v2195 = vadd.f32 0.0, %v2194
          %v2196 = vpop.f32.mrb[0].mxu0
          %2197 = vmatprep.mubr.bf16.mxu0 0
          %2198 = vmatmul.mubr.bf16.gmra.mrb[0].mxu0 %v2029
          %v2199 = vpop.f32.mrb[0].mxu0
          %v2200 = vadd.f32 0.0, %v2199
          %v2201 = vpop.f32.mrb[0].mxu0
          %v2202 = vpop.f32.mrb[0].mxu0
          %v2203 = vadd.f32 0.0, %v2202
          %v2204 = vpop.f32.mrb[0].mxu0
          %2205 = vmatprep.mubr.bf16.mxu0 0
          %2206 = vmatmul.mubr.bf16.gmra.mrb[0].mxu0 %v2030
          %v2207 = vpop.f32.mrb[0].mxu0
          %v2208 = vadd.f32 0.0, %v2207
          %v2209 = vpop.f32.mrb[0].mxu0
          %v2210 = vpop.f32.mrb[0].mxu0
          %v2211 = vadd.f32 0.0, %v2210
          %v2212 = vpop.f32.mrb[0].mxu0
          %2213 = vmatprep.mubr.bf16.mxu0 0
          %2214 = vmatmul.mubr.bf16.gmra.mrb[0].mxu0 %v2031
          %v2215 = vpop.f32.mrb[0].mxu0
          %v2216 = vadd.f32 0.0, %v2215
          %v2217 = vpop.f32.mrb[0].mxu0
          %v2218 = vpop.f32.mrb[0].mxu0
          %v2219 = vadd.f32 0.0, %v2218
          %v2220 = vpop.f32.mrb[0].mxu0
          %2221 = vmatprep.mubr.bf16.mxu0 0
          %2222 = vmatmul.mubr.bf16.gmra.mrb[0].mxu0 %v2032
          %v2223 = vpop.f32.mrb[0].mxu0
          %v2224 = vadd.f32 0.0, %v2223
          %v2225 = vpop.f32.mrb[0].mxu0
          %v2226 = vpop.f32.mrb[0].mxu0
          %v2227 = vadd.f32 0.0, %v2226
          %v2228 = vpop.f32.mrb[0].mxu0
          %2229 = vmatprep.mubr.bf16.mxu0 0
          %2230 = vmatmul.mubr.bf16.gmra.mrb[0].mxu0 %v2033
          %v2231 = vpop.f32.mrb[0].mxu0
          %v2232 = vadd.f32 0.0, %v2231
          %v2233 = vpop.f32.mrb[0].mxu0
          %v2234 = vpop.f32.mrb[0].mxu0
          %v2235 = vadd.f32 0.0, %v2234
          %v2236 = vpop.f32.mrb[0].mxu0
          %2237 = vmatprep.mubr.bf16.mxu0 0
          %2238 = vmatmul.mubr.bf16.gmra.mrb[0].mxu0 %v2034
          %v2239 = vpop.f32.mrb[0].mxu0
          %v2240 = vadd.f32 0.0, %v2239
          %v2241 = vpop.f32.mrb[0].mxu0
          %v2242 = vpop.f32.mrb[0].mxu0
          %v2243 = vadd.f32 0.0, %v2242
          %v2244 = vpop.f32.mrb[0].mxu0
          %2245 = vmatprep.mubr.bf16.mxu0 0
          %2246 = vmatmul.mubr.bf16.gmra.mrb[0].mxu0 %v2035
          %v2247 = vpop.f32.mrb[0].mxu0
          %v2248 = vadd.f32 0.0, %v2247
          %v2249 = vpop.f32.mrb[0].mxu0
          %v2250 = vpop.f32.mrb[0].mxu0
          %v2251 = vadd.f32 0.0, %v2250
          %v2252 = vpop.f32.mrb[0].mxu0
          %2253 = vmatprep.mubr.bf16.mxu0 0
          %2254 = vmatmul.mubr.bf16.gmra.mrb[0].mxu0 %v2036
          %v2255 = vpop.f32.mrb[0].mxu0
          %v2256 = vadd.f32 0.0, %v2255
          %v2257 = vpop.f32.mrb[0].mxu0
          %v2258 = vpop.f32.mrb[0].mxu0
          %v2259 = vadd.f32 0.0, %v2258
          %v2260 = vpop.f32.mrb[0].mxu0
          %2261 = vdwg.mxu0
          %v2262 = vld [vmem:[#allocation12] sm:$0xff]
          %v2263 = vld [vmem:[%s298] sm:$0xff]
          %v2264 = vld [vmem:[%s298 + $0x8] sm:$0xff]
          %2265 = vmatprep.subr.mxu0 0.0
          %2266 = vmatpush1.msra.mxu0 %v2136
          %2267 = vmatprep.subr.mxu0 0.0
          %2268 = vmatpush1.msra.mxu0 %v2139
          %2269 = vmatprep.subr.mxu0 0.0
          %2270 = vmatpush1.msra.mxu0 %v2144
          %2271 = vmatprep.subr.mxu0 0.0
          %2272 = vmatpush1.msra.mxu0 %v2147
          %2273 = vmatprep.subr.mxu0 0.0
          %2274 = vmatpush1.msra.mxu0 %v2152
          %2275 = vmatprep.subr.mxu0 0.0
          %2276 = vmatpush1.msra.mxu0 %v2155
          %2277 = vmatprep.subr.mxu0 0.0
          %2278 = vmatpush1.msra.mxu0 %v2160
          %2279 = vmatprep.subr.mxu0 0.0
          %2280 = vmatpush1.msra.mxu0 %v2163
          %2281 = vmatprep.subr.mxu0 0.0
          %2282 = vmatpush1.msra.mxu0 %v2168
          %2283 = vmatprep.subr.mxu0 0.0
          %2284 = vmatpush1.msra.mxu0 %v2171
          %2285 = vmatprep.subr.mxu0 0.0
          %2286 = vmatpush1.msra.mxu0 %v2176
          %2287 = vmatprep.subr.mxu0 0.0
          %2288 = vmatpush1.msra.mxu0 %v2179
          %2289 = vmatprep.subr.mxu0 0.0
          %2290 = vmatpush1.msra.mxu0 %v2184
          %2291 = vmatprep.subr.mxu0 0.0
          %2292 = vmatpush1.msra.mxu0 %v2187
          %2293 = vmatprep.subr.mxu0 0.0
          %2294 = vmatpush1.msra.mxu0 %v2192
          %2295 = vmatprep.subr.mxu0 0.0
          %2296 = vmatpush1.msra.mxu0 %v2195
          %2297 = vmatprep.subr.mxu0 0.0
          %2298 = vmatpush1.msra.mxu0 %v2200
          %2299 = vmatprep.subr.mxu0 0.0
          %2300 = vmatpush1.msra.mxu0 %v2203
          %2301 = vmatprep.subr.mxu0 0.0
          %2302 = vmatpush1.msra.mxu0 %v2208
          %2303 = vmatprep.subr.mxu0 0.0
          %2304 = vmatpush1.msra.mxu0 %v2211
          %2305 = vmatprep.subr.mxu0 0.0
          %2306 = vmatpush1.msra.mxu0 %v2216
          %2307 = vmatprep.subr.mxu0 0.0
          %2308 = vmatpush1.msra.mxu0 %v2219
          %2309 = vmatprep.subr.mxu0 0.0
          %2310 = vmatpush1.msra.mxu0 %v2224
          %2311 = vmatprep.subr.mxu0 0.0
          %2312 = vmatpush1.msra.mxu0 %v2227
          %2313 = vmatprep.subr.mxu0 0.0
          %2314 = vmatpush1.msra.mxu0 %v2232
          %2315 = vmatprep.subr.mxu0 0.0
          %2316 = vmatpush1.msra.mxu0 %v2235
          %2317 = vmatprep.subr.mxu0 0.0
          %2318 = vmatpush1.msra.mxu0 %v2240
          %2319 = vmatprep.subr.mxu0 0.0
          %2320 = vmatpush1.msra.mxu0 %v2243
          %2321 = vmatprep.subr.mxu0 0.0
          %2322 = vmatpush1.msra.mxu0 %v2248
          %2323 = vmatprep.subr.mxu0 0.0
          %2324 = vmatpush1.msra.mxu0 %v2251
          %2325 = vmatprep.subr.mxu0 0.0
          %2326 = vmatpush1.msra.mxu0 %v2256
          %2327 = vmatprep.subr.mxu0 0.0
          %2328 = vmatpush1.msra.mxu0 %v2259
          %2329 = vmatprep.mubr.f32.mxu0 %v2264
          %2330 = vmatmul.mubr.f32.gmra.mrb[0].mxu0 %v2263
          %v2331 = vpop.f32.mrb[0].mxu0
          %v2332 = vadd.f32 0.0, %v2331
          %v2333 = vpop.f32.mrb[0].mxu0
          %2334 = vdwg.mxu0
          %v2335 = vadd.f32 %v2262, %v2332
          %2336 = vst [vmem:[#allocation12] sm:$0xff] %v2335
        $region72: #{tpu_custom_call.1} parent=39 // pred_fallthru
          _
        // Predicated region
        $region73: #{tpu_custom_call.1} parent=39 // pred_check
          %p2337 = pneg %p164
        $region74: #{tpu_custom_call.1} parent=39 // pred_check_branch
          %2339 = sbr.rel (%p2337) target = $region76
        $region75: #{tpu_custom_call.1} parent=39 // pred_region
          %s2341 = ssub.s32 128, 128
          %2342 = vsyncadd [#allocation5], %s2341
          %s2344 = sshll.u32 [#allocation12], 4
          %s2345 = int_to_ptr.vmem [resolvable:$true] %s2344
          %2347 = dma.vmem_to_hbm [thread:$0]  %s2345, 128, %s5, [#allocation5]
        $region76: #{tpu_custom_call.1} parent=39 // pred_fallthru
          _
        // Predicated region
        $region77: #{tpu_custom_call.1} parent=39 // pred_check
          %p2348 = pneg %p164
        $region78: #{tpu_custom_call.1} parent=39 // pred_check_branch
          %2350 = sbr.rel (%p2348) target = $region80
        $region79: #{tpu_custom_call.1} parent=39 // pred_region
          %2351 = dma.done [#allocation5], 128
        $region80: #{tpu_custom_call.1} parent=39 // pred_fallthru
          _
      $region40: #{tpu_custom_call.1} parent=5 // pred_fallthru
        _
      %p2352 = scmp.le.s32.totalorder 2, %s17
      // Predicated region
      $region81: #{tpu_custom_call.1} parent=5 // pred_check
        %p2353 = pneg %p2352
      $region82: #{tpu_custom_call.1} parent=5 // pred_check_branch
        %2355 = sbr.rel (%p2353) target = $region84
      $region83: #{tpu_custom_call.1} parent=5 // pred_region
        %s2356 = ssub.s32 %s17, 2
      $region84: #{tpu_custom_call.1} parent=5 // pred_fallthru
        _
    $region6: #{tpu_custom_call.1} parent=1 // loop_footer
      %s21 = sadd.s32 1, %s17
    $region7: #{tpu_custom_call.1} parent=1 // loop_footer_branch
      %16 = sbr.rel target = $region3
    $region8: #{tpu_custom_call.1} parent=1 // loop_exit
      _
    %2357 = vsyncpa [#allocation4], 1
    %s2358 = scalar_lea.sflag [#allocation4], 1
    %2359 = vsyncpa %s2358, 1
    %2360 = vsyncpa [#allocation7], 1
    %2361 = vsyncpa [#allocation10], 1
    %2362 = vsyncpa [#allocation5], 1
    %s2363 = scalar_lea.sflag [#allocation5], 1
    %2364 = vsyncpa %s2363, 1

</llo_original>
